<compile_context>
chip_gen: v7x
topology: tpu7x:2x2x1
jax: 0.10.0
libtpu: 0.0.40
codegen_flags: <defaults>
</compile_context>

<pallas_src>
import jax
import jax.numpy as jnp
from jax import lax
from jax.experimental import pallas as pl
from jax.experimental.pallas import tpu as pltpu


def conv_bn_relu_kernel(x_ref, w_ref, b_ref, o_ref, patch_ref):
    # x_ref:     (1, Cin, H+2, W+2)  bf16  zero-padded NCHW tile, 1 batch elem
    # w_ref:     (Cout, 9*Cin)       bf16  BN-folded weights, cols = (ky,kx,ci)
    # b_ref:     (Cout, 1)           f32   BN-folded bias
    # o_ref:     (1, Cout, H*W)      f32   output tile; lane axis = H*W (dense)
    # patch_ref: (9*Cin, H*W)        f32   VMEM scratch: im2col patch matrix
    Cin, Hp, Wp = x_ref.shape[1], x_ref.shape[2], x_ref.shape[3]
    H, W = Hp - 2, Wp - 2

    # Upcast once; the shifted slices / reshapes / scratch stores below run on
    # plain f32 vregs (values remain exactly bf16-representable, so the
    # downcast right before the MXU is lossless).
    xp = x_ref[0].astype(jnp.float32)                     # (Cin, H+2, W+2)

    # im2col into VMEM scratch: row block t = ky*3+kx holds tap (ky, kx).
    for ky in range(3):
        for kx in range(3):
            t = ky * 3 + kx
            tap = xp[:, ky:ky + H, kx:kx + W].reshape(Cin, H * W)
            patch_ref[t * Cin:(t + 1) * Cin, :] = tap

    # One MXU matmul (K = 9*Cin), bf16 operands, f32 accumulation, with the
    # lane axis of the result carrying H*W -> dense (unmasked) output stores.
    patches = patch_ref[...].astype(jnp.bfloat16)         # (9*Cin, H*W)
    acc = jnp.dot(w_ref[...], patches,
                  preferred_element_type=jnp.float32)     # (Cout, H*W)

    acc = acc + b_ref[...]                                # folded BN bias
    o_ref[0] = jnp.maximum(acc, 0.0).astype(o_ref.dtype)  # ReLU


@jax.jit
def conv_bn_relu(x_nchw, weight_oihw, bias, gamma, beta, running_mean,
                 running_var, eps=1e-5):
    """3x3 conv (padding=1) + BatchNorm2d (eval) + ReLU.  NCHW in, NCHW out."""
    N, Cin, H, W = x_nchw.shape
    Cout = weight_oihw.shape[0]

    # ---- Fold BatchNorm (eval mode, running stats) into the conv. ----
    scale = gamma / jnp.sqrt(running_var + eps)                  # (Cout,)
    w_eff = weight_oihw * scale[:, None, None, None]             # (Cout,Cin,3,3)
    b_eff = beta + (bias - running_mean) * scale                 # (Cout,)

    # Weight -> (Cout, 9*Cin) with column order (ky, kx, cin), matching the
    # kernel's im2col row order.  bf16 MXU operands.
    w2d = jnp.transpose(w_eff, (0, 2, 3, 1)).reshape(Cout, 9 * Cin)
    w2d = w2d.astype(jnp.bfloat16)
    b2d = b_eff.astype(jnp.float32).reshape(Cout, 1)

    # bf16 cast + 1-pixel zero halo (fused by XLA into a single pass over x).
    x_pad = jnp.pad(x_nchw.astype(jnp.bfloat16),
                    ((0, 0), (0, 0), (1, 1), (1, 1)))

    flops = 2 * N * H * W * 9 * Cin * Cout
    bytes_accessed = (x_pad.size * 2 + w2d.size * 2 + b2d.size * 4
                      + N * Cout * H * W * 4)

    out = pl.pallas_call(
        conv_bn_relu_kernel,
        out_shape=jax.ShapeDtypeStruct((N, Cout, H * W), x_nchw.dtype),
        grid_spec=pltpu.PrefetchScalarGridSpec(
            num_scalar_prefetch=0,
            grid=(N,),
            in_specs=[
                pl.BlockSpec((1, Cin, H + 2, W + 2), lambda n: (n, 0, 0, 0)),
                pl.BlockSpec((Cout, 9 * Cin), lambda n: (0, 0)),
                pl.BlockSpec((Cout, 1), lambda n: (0, 0)),
            ],
            out_specs=pl.BlockSpec((1, Cout, H * W), lambda n: (n, 0, 0)),
            scratch_shapes=[pltpu.VMEM((9 * Cin, H * W), jnp.float32)],
        ),
        compiler_params=pltpu.CompilerParams(
            dimension_semantics=("parallel",)),
        cost_estimate=pl.CostEstimate(
            flops=flops, transcendentals=0, bytes_accessed=bytes_accessed),
    )(x_pad, w2d, b2d)

    # Free contiguous reshape (no transpose): (N, Cout, H*W) -> (N, Cout, H, W)
    return out.reshape(N, Cout, H, W)


if __name__ == "__main__":
    key = jax.random.PRNGKey(0)
    kx, kw, kb, kg, kbe, km, kv = jax.random.split(key, 7)

    N, Cin, H, W = 2, 4, 16, 16
    Cout = 8
    eps = 1e-5

    x = jax.random.normal(kx, (N, Cin, H, W), dtype=jnp.float32)
    # Conv params (shapes of nn.Conv2d(in_, out, 3, padding=1)).
    fan_in = Cin * 3 * 3
    bound = 1.0 / (fan_in ** 0.5)
    weight = jax.random.uniform(kw, (Cout, Cin, 3, 3), jnp.float32, -bound, bound)
    bias = jax.random.uniform(kb, (Cout,), jnp.float32, -bound, bound)
    # BatchNorm2d parameters / running statistics (eval mode).
    gamma = jax.random.uniform(kg, (Cout,), jnp.float32, 0.5, 1.5)
    beta = 0.1 * jax.random.normal(kbe, (Cout,), dtype=jnp.float32)
    running_mean = 0.1 * jax.random.normal(km, (Cout,), dtype=jnp.float32)
    running_var = jax.random.uniform(kv, (Cout,), jnp.float32, 0.5, 1.5)

    out = conv_bn_relu(x, weight, bias, gamma, beta, running_mean,
                       running_var, eps)
    out = jax.block_until_ready(out)
    assert out.shape == (N, Cout, H, W)

    # Reference: XLA conv on the same bf16-rounded operands, folded BN, ReLU.
    scale = gamma / jnp.sqrt(running_var + eps)
    w_eff = weight * scale[:, None, None, None]
    b_eff = beta + (bias - running_mean) * scale
    ref = lax.conv_general_dilated(
        x.astype(jnp.bfloat16).astype(jnp.float32),
        w_eff.astype(jnp.bfloat16).astype(jnp.float32),
        window_strides=(1, 1), padding=((1, 1), (1, 1)),
        dimension_numbers=("NCHW", "OIHW", "NCHW"))
    ref = jnp.maximum(ref + b_eff[None, :, None, None], 0.0)

    max_err = float(jnp.max(jnp.abs(out - ref)))
    assert jnp.allclose(out, ref, atol=2e-2, rtol=2e-2), max_err

    print("KERNEL_OK")
</pallas_src>

<mosaic_0001>
module attributes {stable_mosaic.version = 11 : i64} {
  func.func @conv_bn_relu_kernel(%arg0: i32, %arg1: memref<1x4x18x18xbf16, #tpu.memory_space<vmem>>, %arg2: memref<8x36xbf16, #tpu.memory_space<vmem>>, %arg3: memref<8x1xf32, #tpu.memory_space<vmem>>, %arg4: memref<1x8x256xf32, #tpu.memory_space<vmem>>, %arg5: memref<36x256xf32, #tpu.memory_space<vmem>>) attributes {dimension_semantics = [#tpu.dimension_semantics<parallel>], iteration_bounds = array<i64: 2>, scalar_prefetch = 0 : i64, scratch_operands = 1 : i64, tpu.core_type = #tpu.core_type<tc>, window_params = [{transform_indices = @transform_0, window_bounds = array<i64: 1, 4, 18, 18>}, {pipeline_mode = #tpu.pipeline_mode<synchronous>, transform_indices = @transform_1, window_bounds = array<i64: 8, 36>}, {pipeline_mode = #tpu.pipeline_mode<synchronous>, transform_indices = @transform_2, window_bounds = array<i64: 8, 1>}, {transform_indices = @transform_3, window_bounds = array<i64: 1, 8, 256>}]} {
    %c0 = arith.constant 0 : index
    %c0_0 = arith.constant 0 : index
    %c0_1 = arith.constant 0 : index
    %c0_2 = arith.constant 0 : index
    %0 = vector.load %arg1[%c0, %c0_0, %c0_1, %c0_2] : memref<1x4x18x18xbf16, #tpu.memory_space<vmem>>, vector<1x4x18x18xbf16>
    %1 = vector.shape_cast %0 : vector<1x4x18x18xbf16> to vector<4x18x18xbf16>
    %2 = arith.extf %1 : vector<4x18x18xbf16> to vector<4x18x18xf32>
    %3 = vector.extract_strided_slice %2 {offsets = [0, 0, 0], sizes = [4, 16, 16], strides = [1, 1, 1]} : vector<4x18x18xf32> to vector<4x16x16xf32>
    %4 = vector.shape_cast %3 : vector<4x16x16xf32> to vector<4x256xf32>
    %c0_3 = arith.constant 0 : index
    %c0_4 = arith.constant 0 : index
    %5 = vector.load %arg5[%c0_3, %c0_4] : memref<36x256xf32, #tpu.memory_space<vmem>>, vector<4x256xf32>
    tpu.vector_store %arg5[%c0_3, %c0_4], %4 {strides = array<i32>} : memref<36x256xf32, #tpu.memory_space<vmem>>, vector<4x256xf32>,
    %6 = vector.extract_strided_slice %2 {offsets = [0, 0, 1], sizes = [4, 16, 16], strides = [1, 1, 1]} : vector<4x18x18xf32> to vector<4x16x16xf32>
    %7 = vector.shape_cast %6 : vector<4x16x16xf32> to vector<4x256xf32>
    %c4 = arith.constant 4 : index
    %c0_5 = arith.constant 0 : index
    %8 = vector.load %arg5[%c4, %c0_5] : memref<36x256xf32, #tpu.memory_space<vmem>>, vector<4x256xf32>
    tpu.vector_store %arg5[%c4, %c0_5], %7 {strides = array<i32>} : memref<36x256xf32, #tpu.memory_space<vmem>>, vector<4x256xf32>,
    %9 = vector.extract_strided_slice %2 {offsets = [0, 0, 2], sizes = [4, 16, 16], strides = [1, 1, 1]} : vector<4x18x18xf32> to vector<4x16x16xf32>
    %10 = vector.shape_cast %9 : vector<4x16x16xf32> to vector<4x256xf32>
    %c8 = arith.constant 8 : index
    %c0_6 = arith.constant 0 : index
    %11 = vector.load %arg5[%c8, %c0_6] : memref<36x256xf32, #tpu.memory_space<vmem>>, vector<4x256xf32>
    tpu.vector_store %arg5[%c8, %c0_6], %10 {strides = array<i32>} : memref<36x256xf32, #tpu.memory_space<vmem>>, vector<4x256xf32>,
    %12 = vector.extract_strided_slice %2 {offsets = [0, 1, 0], sizes = [4, 16, 16], strides = [1, 1, 1]} : vector<4x18x18xf32> to vector<4x16x16xf32>
    %13 = vector.shape_cast %12 : vector<4x16x16xf32> to vector<4x256xf32>
    %c12 = arith.constant 12 : index
    %c0_7 = arith.constant 0 : index
    %14 = vector.load %arg5[%c12, %c0_7] : memref<36x256xf32, #tpu.memory_space<vmem>>, vector<4x256xf32>
    tpu.vector_store %arg5[%c12, %c0_7], %13 {strides = array<i32>} : memref<36x256xf32, #tpu.memory_space<vmem>>, vector<4x256xf32>,
    %15 = vector.extract_strided_slice %2 {offsets = [0, 1, 1], sizes = [4, 16, 16], strides = [1, 1, 1]} : vector<4x18x18xf32> to vector<4x16x16xf32>
    %16 = vector.shape_cast %15 : vector<4x16x16xf32> to vector<4x256xf32>
    %c16 = arith.constant 16 : index
    %c0_8 = arith.constant 0 : index
    %17 = vector.load %arg5[%c16, %c0_8] : memref<36x256xf32, #tpu.memory_space<vmem>>, vector<4x256xf32>
    tpu.vector_store %arg5[%c16, %c0_8], %16 {strides = array<i32>} : memref<36x256xf32, #tpu.memory_space<vmem>>, vector<4x256xf32>,
    %18 = vector.extract_strided_slice %2 {offsets = [0, 1, 2], sizes = [4, 16, 16], strides = [1, 1, 1]} : vector<4x18x18xf32> to vector<4x16x16xf32>
    %19 = vector.shape_cast %18 : vector<4x16x16xf32> to vector<4x256xf32>
    %c20 = arith.constant 20 : index
    %c0_9 = arith.constant 0 : index
    %20 = vector.load %arg5[%c20, %c0_9] : memref<36x256xf32, #tpu.memory_space<vmem>>, vector<4x256xf32>
    tpu.vector_store %arg5[%c20, %c0_9], %19 {strides = array<i32>} : memref<36x256xf32, #tpu.memory_space<vmem>>, vector<4x256xf32>,
    %21 = vector.extract_strided_slice %2 {offsets = [0, 2, 0], sizes = [4, 16, 16], strides = [1, 1, 1]} : vector<4x18x18xf32> to vector<4x16x16xf32>
    %22 = vector.shape_cast %21 : vector<4x16x16xf32> to vector<4x256xf32>
    %c24 = arith.constant 24 : index
    %c0_10 = arith.constant 0 : index
    %23 = vector.load %arg5[%c24, %c0_10] : memref<36x256xf32, #tpu.memory_space<vmem>>, vector<4x256xf32>
    tpu.vector_store %arg5[%c24, %c0_10], %22 {strides = array<i32>} : memref<36x256xf32, #tpu.memory_space<vmem>>, vector<4x256xf32>,
    %24 = vector.extract_strided_slice %2 {offsets = [0, 2, 1], sizes = [4, 16, 16], strides = [1, 1, 1]} : vector<4x18x18xf32> to vector<4x16x16xf32>
    %25 = vector.shape_cast %24 : vector<4x16x16xf32> to vector<4x256xf32>
    %c28 = arith.constant 28 : index
    %c0_11 = arith.constant 0 : index
    %26 = vector.load %arg5[%c28, %c0_11] : memref<36x256xf32, #tpu.memory_space<vmem>>, vector<4x256xf32>
    tpu.vector_store %arg5[%c28, %c0_11], %25 {strides = array<i32>} : memref<36x256xf32, #tpu.memory_space<vmem>>, vector<4x256xf32>,
    %27 = vector.extract_strided_slice %2 {offsets = [0, 2, 2], sizes = [4, 16, 16], strides = [1, 1, 1]} : vector<4x18x18xf32> to vector<4x16x16xf32>
    %28 = vector.shape_cast %27 : vector<4x16x16xf32> to vector<4x256xf32>
    %c32 = arith.constant 32 : index
    %c0_12 = arith.constant 0 : index
    %29 = vector.load %arg5[%c32, %c0_12] : memref<36x256xf32, #tpu.memory_space<vmem>>, vector<4x256xf32>
    tpu.vector_store %arg5[%c32, %c0_12], %28 {strides = array<i32>} : memref<36x256xf32, #tpu.memory_space<vmem>>, vector<4x256xf32>,
    %c0_13 = arith.constant 0 : index
    %c0_14 = arith.constant 0 : index
    %30 = vector.load %arg5[%c0_13, %c0_14] : memref<36x256xf32, #tpu.memory_space<vmem>>, vector<36x256xf32>
    %31 = arith.truncf %30 : vector<36x256xf32> to vector<36x256xbf16>
    %c0_15 = arith.constant 0 : index
    %c0_16 = arith.constant 0 : index
    %32 = vector.load %arg2[%c0_15, %c0_16] : memref<8x36xbf16, #tpu.memory_space<vmem>>, vector<8x36xbf16>
    %cst = arith.constant dense<0.000000e+00> : vector<8x256xf32>
    %33 = tpu.matmul %32, %31, %cst {dimension_numbers = #tpu.dot_dimension_numbers<[1], [0], [0], [1], [0, 0, 1, 1], [], []>} : vector<8x36xbf16>, vector<36x256xbf16>, vector<8x256xf32> -> vector<8x256xf32>
    %c0_17 = arith.constant 0 : index
    %c0_18 = arith.constant 0 : index
    %34 = vector.load %arg3[%c0_17, %c0_18] : memref<8x1xf32, #tpu.memory_space<vmem>>, vector<8x1xf32>
    %35 = vector.broadcast %34 : vector<8x1xf32> to vector<8x256xf32>
    %36 = arith.addf %33, %35 : vector<8x256xf32>
    %cst_19 = arith.constant 0.000000e+00 : f32
    %37 = vector.broadcast %cst_19 : f32 to vector<8x256xf32>
    %38 = arith.maximumf %36, %37 : vector<8x256xf32>
    %c0_20 = arith.constant 0 : index
    %c0_21 = arith.constant 0 : index
    %c0_22 = arith.constant 0 : index
    %39 = vector.load %arg4[%c0_20, %c0_21, %c0_22] : memref<1x8x256xf32, #tpu.memory_space<vmem>>, vector<1x8x256xf32>
    %40 = vector.shape_cast %39 : vector<1x8x256xf32> to vector<8x256xf32>
    %41 = vector.shape_cast %38 : vector<8x256xf32> to vector<1x8x256xf32>
    tpu.vector_store %arg4[%c0_20, %c0_21, %c0_22], %41 {strides = array<i32>} : memref<1x8x256xf32, #tpu.memory_space<vmem>>, vector<1x8x256xf32>,
    return
  }
  func.func @transform_0(%arg0: i32) -> (i32, i32, i32, i32) {
    %c0_i32 = arith.constant 0 : i32
    %c0_i32_0 = arith.constant 0 : i32
    %c0_i32_1 = arith.constant 0 : i32
    %c0_i32_2 = arith.constant 0 : i32
    return %arg0, %c0_i32, %c0_i32_0, %c0_i32_1 : i32, i32, i32, i32
  }
  func.func @transform_1(%arg0: i32) -> (i32, i32) {
    %c0_i32 = arith.constant 0 : i32
    %c0_i32_0 = arith.constant 0 : i32
    %c0_i32_1 = arith.constant 0 : i32
    return %c0_i32, %c0_i32_0 : i32, i32
  }
  func.func @transform_2(%arg0: i32) -> (i32, i32) {
    %c0_i32 = arith.constant 0 : i32
    %c0_i32_0 = arith.constant 0 : i32
    %c0_i32_1 = arith.constant 0 : i32
    return %c0_i32, %c0_i32_0 : i32, i32
  }
  func.func @transform_3(%arg0: i32) -> (i32, i32, i32) {
    %c0_i32 = arith.constant 0 : i32
    %c0_i32_0 = arith.constant 0 : i32
    %c0_i32_1 = arith.constant 0 : i32
    return %arg0, %c0_i32, %c0_i32_0 : i32, i32, i32
  }
}

</mosaic_0001>

<llo_original>
// kernel: conv_bn_relu.1
$region0: #{conv_bn_relu.1}
  #allocation0 [shape = 'u32[]', space=smem, size = 0x4, offset = 0x4, fixed_abs, tag = 'smem constant byte address 0x4 - core index']
  #allocation1 [shape = 'u32[144,128]{1,0:T(1,128)}', space=vmem, size = 0x12000, scoped, tag = 'internal scratch']
  #allocation2 [shape = 'f32[36,256]{1,0:T(8,128)}', space=vmem, size = 0xa000, scoped, tag = 'scratch operand']
  %s0 = inlined_call_operand.vmem [shape: bf16[2,4,18,18], index: 0, kind: input, shape index: {}]
  %s1 = inlined_call_operand.vmem [shape: bf16[8,36], index: 1, kind: input, shape index: {}]
  %s2 = inlined_call_operand.vmem [shape: f32[8,1], index: 2, kind: input, shape index: {}]
  %s3 = inlined_call_operand.vmem [shape: f32[2,8,256], index: 3, kind: output, shape index: {}]
  %s4 = sld [smem:[#allocation0]]
  $region45: #{conv_bn_relu.1} parent=0
    _
  %s6 = ssub.s32 1, %s4
  %s7 = scalar_select 0, %s6, %s4
  loop: start=0, step=1, limit=4
  $region2: #{conv_bn_relu.1} parent=0 // loop_pre_header
    _
  $region3: #{conv_bn_relu.1} parent=0 // loop_header
    %s9 = sphi 0, %s13
    %p10 = scmp.ge.s32.totalorder %s9, 4
    %s19 = sphi 0, %s21
    %s22 = sphi 0, %s19
    %s23 = sphi 0, %s22
    %s39 = sphi 0, %s23
    %s43 = sphi 0, %s43
    %s45 = sphi 0, %s43
    %s46 = sphi 0, %s45
    %s60 = sphi 0, %s46
    %s64 = sphi 0, %s64
    %s66 = sphi 0, %s64
    %s67 = sphi 0, %s66
    %s81 = sphi 0, %s67
    %s87 = sphi 0, %s89
    %s90 = sphi 0, %s87
    %s91 = sphi 0, %s90
    %s107 = sphi 0, %s91
  $region4: #{conv_bn_relu.1} parent=0 // loop_header_branch
    %12 = sbr.rel (%p10) target = $region8
  $region5: #{conv_bn_relu.1} parent=0 // loop_body
    %s14 = ssub.s32 %s9, 1
    %s15 = ssub.s32 %s9, 2
    %s16 = sadd.s32 %s9, 1
    %s17 = ssub.s32 %s9, %s16
    %p18 = scmp.eq.s32.totalorder %s17, 0
    %s20 = sadd.s32 %s19, 1
    %s21 = scalar_select %p18, %s19, %s20
    %p24 = pneg %p18
    %p25 = scmp.eq.s32.totalorder %s9, 1
    %p26 = por %p24, %p25
    %p27 = scmp.ne.s32.totalorder %s19, %s22
    %p28 = scmp.eq.s32.totalorder %s9, 0
    %p29 = por %p27, %p28
    %p30 = scmp.ne.s32.totalorder %s19, %s22
    %p31 = scmp.eq.s32.totalorder %s14, 1
    %p32 = por %p30, %p31
    %p33 = scmp.ne.s32.totalorder %s22, %s23
    %p34 = scmp.eq.s32.totalorder %s14, 0
    %p35 = por %p33, %p34
    %p36 = scmp.ne.s32.totalorder %s22, %s23
    %p37 = scmp.eq.s32.totalorder %s15, 1
    %p38 = por %p36, %p37
    %p40 = scmp.ne.s32.totalorder %s23, %s39
    %p41 = scmp.eq.s32.totalorder %s15, 0
    %p42 = por %p40, %p41
    %s44 = sadd.s32 %s43, 1
    %p47 = scmp.eq.s32.totalorder %s9, 1
    %p48 = scmp.ne.s32.totalorder %s43, %s45
    %p49 = scmp.eq.s32.totalorder %s9, 0
    %p50 = por %p48, %p49
    %p51 = scmp.ne.s32.totalorder %s43, %s45
    %p52 = scmp.eq.s32.totalorder %s14, 1
    %p53 = por %p51, %p52
    %p54 = scmp.ne.s32.totalorder %s45, %s46
    %p55 = scmp.eq.s32.totalorder %s14, 0
    %p56 = por %p54, %p55
    %p57 = scmp.ne.s32.totalorder %s45, %s46
    %p58 = scmp.eq.s32.totalorder %s15, 1
    %p59 = por %p57, %p58
    %p61 = scmp.ne.s32.totalorder %s46, %s60
    %p62 = scmp.eq.s32.totalorder %s15, 0
    %p63 = por %p61, %p62
    %s65 = sadd.s32 %s64, 1
    %p68 = scmp.eq.s32.totalorder %s9, 1
    %p69 = scmp.ne.s32.totalorder %s64, %s66
    %p70 = scmp.eq.s32.totalorder %s9, 0
    %p71 = por %p69, %p70
    %p72 = scmp.ne.s32.totalorder %s64, %s66
    %p73 = scmp.eq.s32.totalorder %s14, 1
    %p74 = por %p72, %p73
    %p75 = scmp.ne.s32.totalorder %s66, %s67
    %p76 = scmp.eq.s32.totalorder %s14, 0
    %p77 = por %p75, %p76
    %p78 = scmp.ne.s32.totalorder %s66, %s67
    %p79 = scmp.eq.s32.totalorder %s15, 1
    %p80 = por %p78, %p79
    %p82 = scmp.ne.s32.totalorder %s67, %s81
    %p83 = scmp.eq.s32.totalorder %s15, 0
    %p84 = por %p82, %p83
    %s85 = ssub.s32 %s9, %s16
    %p86 = scmp.eq.s32.totalorder %s85, 0
    %s88 = sadd.s32 %s87, 1
    %s89 = scalar_select %p86, %s87, %s88
    %p92 = pneg %p86
    %p93 = scmp.eq.s32.totalorder %s9, 1
    %p94 = por %p92, %p93
    %p95 = scmp.ne.s32.totalorder %s87, %s90
    %p96 = scmp.eq.s32.totalorder %s9, 0
    %p97 = por %p95, %p96
    %p98 = scmp.ne.s32.totalorder %s87, %s90
    %p99 = scmp.eq.s32.totalorder %s14, 1
    %p100 = por %p98, %p99
    %p101 = scmp.ne.s32.totalorder %s90, %s91
    %p102 = scmp.eq.s32.totalorder %s14, 0
    %p103 = por %p101, %p102
    %p104 = scmp.ne.s32.totalorder %s90, %s91
    %p105 = scmp.eq.s32.totalorder %s15, 1
    %p106 = por %p104, %p105
    %p108 = scmp.ne.s32.totalorder %s91, %s107
    %p109 = scmp.eq.s32.totalorder %s15, 0
    %p110 = por %p108, %p109
    %p111 = scmp.le.s32.totalorder 1, %s9
    %p112 = scmp.lt.s32.totalorder %s9, 3
    %p113 = pnand %p111, %p112
    %p114 = pneg %p113
    // Predicated region
    $region9: #{conv_bn_relu.1} parent=5 // pred_check
      _
    $region10: #{conv_bn_relu.1} parent=5 // pred_check_branch
      %116 = sbr.rel (%p113) target = $region12
    $region11: #{conv_bn_relu.1} parent=5 // pred_region
      %s117 = ssub.s32 %s9, 1
      // Predicated region
      $region13: #{conv_bn_relu.1} parent=11 // pred_check
        %p118 = pneg %p56
      $region14: #{conv_bn_relu.1} parent=11 // pred_check_branch
        %120 = sbr.rel (%p118) target = $region16
      $region15: #{conv_bn_relu.1} parent=11 // pred_region
        _
      $region16: #{conv_bn_relu.1} parent=11 // pred_fallthru
        _
      // Predicated region
      $region17: #{conv_bn_relu.1} parent=11 // pred_check
        %p121 = pneg %p77
      $region18: #{conv_bn_relu.1} parent=11 // pred_check_branch
        %123 = sbr.rel (%p121) target = $region20
      $region19: #{conv_bn_relu.1} parent=11 // pred_region
        _
      $region20: #{conv_bn_relu.1} parent=11 // pred_fallthru
        _
    $region12: #{conv_bn_relu.1} parent=5 // pred_fallthru
      _
    %p124 = scmp.lt.s32.totalorder %s9, 2
    // Predicated region
    $region21: #{conv_bn_relu.1} parent=5 // pred_check
      %p125 = pneg %p124
    $region22: #{conv_bn_relu.1} parent=5 // pred_check_branch
      %127 = sbr.rel (%p125) target = $region24
    $region23: #{conv_bn_relu.1} parent=5 // pred_region
      // Predicated region
      $region25: #{conv_bn_relu.1} parent=23 // pred_check
        %p128 = pneg %p29
      $region26: #{conv_bn_relu.1} parent=23 // pred_check_branch
        %130 = sbr.rel (%p128) target = $region28
      $region27: #{conv_bn_relu.1} parent=23 // pred_region
        %p131 = scmp.lt.s32.totalorder %s9, 1
        %s132 = scalar_select %p131, %s9, 1
        %s133 = smul.addr %s132, 12
        %s134 = smul.addr %s133, 4
        %s135 = scalar_lea.vmem %s0, %s134
      $region28: #{conv_bn_relu.1} parent=23 // pred_fallthru
        _
    $region24: #{conv_bn_relu.1} parent=5 // pred_fallthru
      _
    %p136 = scmp.le.s32.totalorder 1, %s9
    %p137 = scmp.lt.s32.totalorder %s9, 3
    %p138 = pnand %p136, %p137
    %p139 = pneg %p138
    // Predicated region
    $region29: #{conv_bn_relu.1} parent=5 // pred_check
      _
    $region30: #{conv_bn_relu.1} parent=5 // pred_check_branch
      %141 = sbr.rel (%p138) target = $region32
    $region31: #{conv_bn_relu.1} parent=5 // pred_region
      %s142 = ssub.s32 %s9, 1
      %p143 = scmp.lt.s32.totalorder %s14, 1
      %s144 = scalar_select %p143, %s14, 1
      %s145 = smul.addr %s144, 12
      %s146 = smul.addr %s145, 4
      %s147 = scalar_lea.vmem %s0, %s146
      %p148 = pneg %p35
      %p149 = pneg %p32
      %p150 = pneg %p56
      %p151 = pneg %p53
      %p152 = pneg %p77
      %p153 = pneg %p74
      %p154 = pneg %p103
      %p155 = pneg %p100
      %p156 = scmp.lt.s32.totalorder %s14, 1
      %s157 = scalar_select %p156, %s14, 1
      %s158 = smul.addr %s157, 2
      %s159 = smul.addr %s158, 8
      %s160 = scalar_lea.vmem %s3, %s159
      %p161 = scmp.lt.s32.totalorder %s14, 1
      %s162 = scalar_select %p161, %s14, 1
      %s163 = smul.addr %s162, 12
      %s164 = smul.addr %s163, 4
      %s165 = scalar_lea.vmem %s0, %s164
      %p166 = scmp.lt.s32.totalorder %s14, 1
      %s167 = scalar_select %p166, %s14, 1
      %s168 = smul.addr %s167, 2
      %s169 = smul.addr %s168, 8
      %s170 = scalar_lea.vmem %s3, %s169
      %v172 = vld [vmem:[%s165] sm:$0xf]
      %v173 = vld [vmem:[%s165 + $0x4] sm:$0xf]
      %v174 = vld [vmem:[%s165 + $0x8] sm:$0x1]
      %v175 = vld [vmem:[%s165 + $0xc] sm:$0xf]
      %v176 = vld [vmem:[%s165 + $0x10] sm:$0xf]
      %v177 = vld [vmem:[%s165 + $0x14] sm:$0x1]
      %v178 = vld [vmem:[%s165 + $0x18] sm:$0xf]
      %v179 = vld [vmem:[%s165 + $0x1c] sm:$0xf]
      %v180 = vld [vmem:[%s165 + $0x20] sm:$0x1]
      %v181 = vld [vmem:[%s165 + $0x24] sm:$0xf]
      %v182 = vld [vmem:[%s165 + $0x28] sm:$0xf]
      %v183 = vld [vmem:[%s165 + $0x2c] sm:$0x1]
      %v184 = vunpack.c.l.bf16 %v172
      %v185 = vunpack.c.l.bf16 %v173
      %v186 = vunpack.c.l.bf16 %v174
      %v187 = vunpack.c.l.bf16 %v175
      %v188 = vunpack.c.l.bf16 %v176
      %v189 = vunpack.c.l.bf16 %v177
      %v190 = vunpack.c.l.bf16 %v178
      %v191 = vunpack.c.l.bf16 %v179
      %v192 = vunpack.c.l.bf16 %v180
      %v193 = vunpack.c.l.bf16 %v181
      %v194 = vunpack.c.l.bf16 %v182
      %v195 = vunpack.c.l.bf16 %v183
      %v196 = vcombine.low %v184, %v190
      %v197 = vcombine.high %v184, %v190
      %v199 = vunpack.c.l.s4 1983009808
      %v200 = vunpack.c.0.s8 %v199
      %v201 = vlaneseq
      %v202 = vshrl.u32 %v201, 7
      %v203 = vsub.s32 %v200, %v202
      %v204 = vrot.slane %v196, %v203
      %v206 = vunpack.c.l.s4 1983009808
      %v207 = vunpack.c.0.s8 %v206
      %v208 = vlaneseq
      %v209 = vshrl.u32 %v208, 7
      %v210 = vsub.s32 %v207, %v209
      %v211 = vrot.slane %v197, %v210
      %v212 = vcombine.low %v187, %v193
      %v213 = vcombine.high %v187, %v193
      %v215 = vunpack.c.l.s4 1983009808
      %v216 = vunpack.c.0.s8 %v215
      %v217 = vlaneseq
      %v218 = vshrl.u32 %v217, 7
      %v219 = vsub.s32 %v216, %v218
      %v220 = vrot.slane %v212, %v219
      %v222 = vunpack.c.l.s4 1983009808
      %v223 = vunpack.c.0.s8 %v222
      %v224 = vlaneseq
      %v225 = vshrl.u32 %v224, 7
      %v226 = vsub.s32 %v223, %v225
      %v227 = vrot.slane %v213, %v226
      %v228 = vcombine.low %v204, %v220
      %v229 = vcombine.high %v204, %v220
      %v231 = vunpack.c.l.s4 1934713408
      %v232 = vunpack.c.0.s8 %v231
      %v233 = vlaneseq
      %v234 = vshrl.u32 %v233, 7
      %v235 = vsub.s32 %v232, %v234
      %v236 = vrot.slane %v228, %v235
      %v238 = vunpack.c.l.s4 1934713408
      %v239 = vunpack.c.0.s8 %v238
      %v240 = vlaneseq
      %v241 = vshrl.u32 %v240, 7
      %v242 = vsub.s32 %v239, %v241
      %v243 = vrot.slane %v229, %v242
      %v244 = vcombine.low %v211, %v227
      %v245 = vcombine.high %v211, %v227
      %v247 = vunpack.c.l.s4 1934713408
      %v248 = vunpack.c.0.s8 %v247
      %v249 = vlaneseq
      %v250 = vshrl.u32 %v249, 7
      %v251 = vsub.s32 %v248, %v250
      %v252 = vrot.slane %v244, %v251
      %v254 = vunpack.c.l.s4 1934713408
      %v255 = vunpack.c.0.s8 %v254
      %v256 = vlaneseq
      %v257 = vshrl.u32 %v256, 7
      %v258 = vsub.s32 %v255, %v257
      %v259 = vrot.slane %v245, %v258
      %v260 = vcombine.high %v236, 0.0
      %v261 = vcombine.high %v243, 0.0
      %v262 = vcombine.high %v252, 0.0
      %v263 = vcombine.high %v259, 0.0
      %v264 = vcombine.low %v185, %v191
      %v265 = vcombine.high %v185, %v191
      %v267 = vunpack.c.l.s4 1983009808
      %v268 = vunpack.c.0.s8 %v267
      %v269 = vlaneseq
      %v270 = vshrl.u32 %v269, 7
      %v271 = vsub.s32 %v268, %v270
      %v272 = vrot.slane %v264, %v271
      %v274 = vunpack.c.l.s4 1983009808
      %v275 = vunpack.c.0.s8 %v274
      %v276 = vlaneseq
      %v277 = vshrl.u32 %v276, 7
      %v278 = vsub.s32 %v275, %v277
      %v279 = vrot.slane %v265, %v278
      %v280 = vcombine.low %v188, %v194
      %v281 = vcombine.high %v188, %v194
      %v283 = vunpack.c.l.s4 1983009808
      %v284 = vunpack.c.0.s8 %v283
      %v285 = vlaneseq
      %v286 = vshrl.u32 %v285, 7
      %v287 = vsub.s32 %v284, %v286
      %v288 = vrot.slane %v280, %v287
      %v290 = vunpack.c.l.s4 1983009808
      %v291 = vunpack.c.0.s8 %v290
      %v292 = vlaneseq
      %v293 = vshrl.u32 %v292, 7
      %v294 = vsub.s32 %v291, %v293
      %v295 = vrot.slane %v281, %v294
      %v296 = vcombine.low %v272, %v288
      %v297 = vcombine.high %v272, %v288
      %v299 = vunpack.c.l.s4 1934713408
      %v300 = vunpack.c.0.s8 %v299
      %v301 = vlaneseq
      %v302 = vshrl.u32 %v301, 7
      %v303 = vsub.s32 %v300, %v302
      %v304 = vrot.slane %v296, %v303
      %v306 = vunpack.c.l.s4 1934713408
      %v307 = vunpack.c.0.s8 %v306
      %v308 = vlaneseq
      %v309 = vshrl.u32 %v308, 7
      %v310 = vsub.s32 %v307, %v309
      %v311 = vrot.slane %v297, %v310
      %v312 = vcombine.low %v279, %v295
      %v313 = vcombine.high %v279, %v295
      %v315 = vunpack.c.l.s4 1934713408
      %v316 = vunpack.c.0.s8 %v315
      %v317 = vlaneseq
      %v318 = vshrl.u32 %v317, 7
      %v319 = vsub.s32 %v316, %v318
      %v320 = vrot.slane %v312, %v319
      %v322 = vunpack.c.l.s4 1934713408
      %v323 = vunpack.c.0.s8 %v322
      %v324 = vlaneseq
      %v325 = vshrl.u32 %v324, 7
      %v326 = vsub.s32 %v323, %v325
      %v327 = vrot.slane %v313, %v326
      %v328 = vcombine.high %v304, 0.0
      %v329 = vcombine.high %v311, 0.0
      %v330 = vcombine.high %v320, 0.0
      %v331 = vcombine.high %v327, 0.0
      %333 = vrot.lane.b32.xlu0 %v260, 16
      %v334 = vpop.permute.xlu0 %333
      %337 = vrot.lane.b32.xlu0 %v243, 32
      %v338 = vpop.permute.xlu0 %337
      %341 = vrot.lane.b32.xlu0 %v261, 48
      %v342 = vpop.permute.xlu0 %341
      %345 = vrot.lane.b32.xlu0 %v252, 64
      %v346 = vpop.permute.xlu0 %345
      %349 = vrot.lane.b32.xlu0 %v262, 80
      %v350 = vpop.permute.xlu0 %349
      %353 = vrot.lane.b32.xlu0 %v259, 96
      %v354 = vpop.permute.xlu0 %353
      %357 = vrot.lane.b32.xlu0 %v263, 112
      %v358 = vpop.permute.xlu0 %357
      %361 = vrot.lane.b32.xlu0 %v328, 16
      %v362 = vpop.permute.xlu0 %361
      %365 = vrot.lane.b32.xlu0 %v311, 32
      %v366 = vpop.permute.xlu0 %365
      %369 = vrot.lane.b32.xlu0 %v329, 48
      %v370 = vpop.permute.xlu0 %369
      %373 = vrot.lane.b32.xlu0 %v320, 64
      %v374 = vpop.permute.xlu0 %373
      %377 = vrot.lane.b32.xlu0 %v330, 80
      %v378 = vpop.permute.xlu0 %377
      %381 = vrot.lane.b32.xlu0 %v327, 96
      %v382 = vpop.permute.xlu0 %381
      %385 = vrot.lane.b32.xlu0 %v331, 112
      %v386 = vpop.permute.xlu0 %385
      %vm388 = vcmask 130048
      %v389 = vsel %vm388, %v236, %v334
      %vm390 = vcmask 261120
      %v391 = vsel %vm390, %v389, %v338
      %vm392 = vcmask 392192
      %v393 = vsel %vm392, %v391, %v342
      %vm394 = vcmask 523264
      %v395 = vsel %vm394, %v393, %v346
      %vm396 = vcmask 654336
      %v397 = vsel %vm396, %v395, %v350
      %vm398 = vcmask 785408
      %v399 = vsel %vm398, %v397, %v354
      %vm400 = vcmask 916480
      %v401 = vsel %vm400, %v399, %v358
      %v402 = vsel %vm388, %v304, %v362
      %v403 = vsel %vm390, %v402, %v366
      %v404 = vsel %vm392, %v403, %v370
      %v405 = vsel %vm394, %v404, %v374
      %v406 = vsel %vm396, %v405, %v378
      %v407 = vsel %vm398, %v406, %v382
      %v408 = vsel %vm400, %v407, %v386
      %409 = vst [vmem:[#allocation2] sm:$0xf] %v401
      %410 = vst [vmem:[#allocation2 + $0x8] sm:$0xf] %v408
      %419 = vrot.lane.b32.xlu0 %v184, 127
      %v420 = vpop.permute.xlu0 %419
      %421 = vrot.lane.b32.xlu0 %v185, 127
      %v422 = vpop.permute.xlu0 %421
      %423 = vrot.lane.b32.xlu0 %v187, 127
      %v424 = vpop.permute.xlu0 %423
      %425 = vrot.lane.b32.xlu0 %v188, 127
      %v426 = vpop.permute.xlu0 %425
      %427 = vrot.lane.b32.xlu0 %v190, 127
      %v428 = vpop.permute.xlu0 %427
      %429 = vrot.lane.b32.xlu0 %v191, 127
      %v430 = vpop.permute.xlu0 %429
      %431 = vrot.lane.b32.xlu0 %v193, 127
      %v432 = vpop.permute.xlu0 %431
      %433 = vrot.lane.b32.xlu0 %v194, 127
      %v434 = vpop.permute.xlu0 %433
      %v443 = vcombine.low %v420, %v428
      %v444 = vcombine.high %v420, %v428
      %v446 = vunpack.c.l.s4 1983009808
      %v447 = vunpack.c.0.s8 %v446
      %v448 = vlaneseq
      %v449 = vshrl.u32 %v448, 7
      %v450 = vsub.s32 %v447, %v449
      %v451 = vrot.slane %v443, %v450
      %v453 = vunpack.c.l.s4 1983009808
      %v454 = vunpack.c.0.s8 %v453
      %v455 = vlaneseq
      %v456 = vshrl.u32 %v455, 7
      %v457 = vsub.s32 %v454, %v456
      %v458 = vrot.slane %v444, %v457
      %v459 = vcombine.low %v424, %v432
      %v460 = vcombine.high %v424, %v432
      %v462 = vunpack.c.l.s4 1983009808
      %v463 = vunpack.c.0.s8 %v462
      %v464 = vlaneseq
      %v465 = vshrl.u32 %v464, 7
      %v466 = vsub.s32 %v463, %v465
      %v467 = vrot.slane %v459, %v466
      %v469 = vunpack.c.l.s4 1983009808
      %v470 = vunpack.c.0.s8 %v469
      %v471 = vlaneseq
      %v472 = vshrl.u32 %v471, 7
      %v473 = vsub.s32 %v470, %v472
      %v474 = vrot.slane %v460, %v473
      %v475 = vcombine.low %v451, %v467
      %v476 = vcombine.high %v451, %v467
      %v478 = vunpack.c.l.s4 1934713408
      %v479 = vunpack.c.0.s8 %v478
      %v480 = vlaneseq
      %v481 = vshrl.u32 %v480, 7
      %v482 = vsub.s32 %v479, %v481
      %v483 = vrot.slane %v475, %v482
      %v485 = vunpack.c.l.s4 1934713408
      %v486 = vunpack.c.0.s8 %v485
      %v487 = vlaneseq
      %v488 = vshrl.u32 %v487, 7
      %v489 = vsub.s32 %v486, %v488
      %v490 = vrot.slane %v476, %v489
      %v491 = vcombine.low %v458, %v474
      %v492 = vcombine.high %v458, %v474
      %v494 = vunpack.c.l.s4 1934713408
      %v495 = vunpack.c.0.s8 %v494
      %v496 = vlaneseq
      %v497 = vshrl.u32 %v496, 7
      %v498 = vsub.s32 %v495, %v497
      %v499 = vrot.slane %v491, %v498
      %v501 = vunpack.c.l.s4 1934713408
      %v502 = vunpack.c.0.s8 %v501
      %v503 = vlaneseq
      %v504 = vshrl.u32 %v503, 7
      %v505 = vsub.s32 %v502, %v504
      %v506 = vrot.slane %v492, %v505
      %v507 = vcombine.high %v483, 0.0
      %v508 = vcombine.high %v490, 0.0
      %v509 = vcombine.high %v499, 0.0
      %v510 = vcombine.high %v506, 0.0
      %v511 = vcombine.low %v422, %v430
      %v512 = vcombine.high %v422, %v430
      %v514 = vunpack.c.l.s4 1983009808
      %v515 = vunpack.c.0.s8 %v514
      %v516 = vlaneseq
      %v517 = vshrl.u32 %v516, 7
      %v518 = vsub.s32 %v515, %v517
      %v519 = vrot.slane %v511, %v518
      %v521 = vunpack.c.l.s4 1983009808
      %v522 = vunpack.c.0.s8 %v521
      %v523 = vlaneseq
      %v524 = vshrl.u32 %v523, 7
      %v525 = vsub.s32 %v522, %v524
      %v526 = vrot.slane %v512, %v525
      %v527 = vcombine.low %v426, %v434
      %v528 = vcombine.high %v426, %v434
      %v530 = vunpack.c.l.s4 1983009808
      %v531 = vunpack.c.0.s8 %v530
      %v532 = vlaneseq
      %v533 = vshrl.u32 %v532, 7
      %v534 = vsub.s32 %v531, %v533
      %v535 = vrot.slane %v527, %v534
      %v537 = vunpack.c.l.s4 1983009808
      %v538 = vunpack.c.0.s8 %v537
      %v539 = vlaneseq
      %v540 = vshrl.u32 %v539, 7
      %v541 = vsub.s32 %v538, %v540
      %v542 = vrot.slane %v528, %v541
      %v543 = vcombine.low %v519, %v535
      %v544 = vcombine.high %v519, %v535
      %v546 = vunpack.c.l.s4 1934713408
      %v547 = vunpack.c.0.s8 %v546
      %v548 = vlaneseq
      %v549 = vshrl.u32 %v548, 7
      %v550 = vsub.s32 %v547, %v549
      %v551 = vrot.slane %v543, %v550
      %v553 = vunpack.c.l.s4 1934713408
      %v554 = vunpack.c.0.s8 %v553
      %v555 = vlaneseq
      %v556 = vshrl.u32 %v555, 7
      %v557 = vsub.s32 %v554, %v556
      %v558 = vrot.slane %v544, %v557
      %v559 = vcombine.low %v526, %v542
      %v560 = vcombine.high %v526, %v542
      %v562 = vunpack.c.l.s4 1934713408
      %v563 = vunpack.c.0.s8 %v562
      %v564 = vlaneseq
      %v565 = vshrl.u32 %v564, 7
      %v566 = vsub.s32 %v563, %v565
      %v567 = vrot.slane %v559, %v566
      %v569 = vunpack.c.l.s4 1934713408
      %v570 = vunpack.c.0.s8 %v569
      %v571 = vlaneseq
      %v572 = vshrl.u32 %v571, 7
      %v573 = vsub.s32 %v570, %v572
      %v574 = vrot.slane %v560, %v573
      %v575 = vcombine.high %v551, 0.0
      %v576 = vcombine.high %v558, 0.0
      %v577 = vcombine.high %v567, 0.0
      %v578 = vcombine.high %v574, 0.0
      %580 = vrot.lane.b32.xlu0 %v507, 16
      %v581 = vpop.permute.xlu0 %580
      %584 = vrot.lane.b32.xlu0 %v490, 32
      %v585 = vpop.permute.xlu0 %584
      %588 = vrot.lane.b32.xlu0 %v508, 48
      %v589 = vpop.permute.xlu0 %588
      %592 = vrot.lane.b32.xlu0 %v499, 64
      %v593 = vpop.permute.xlu0 %592
      %596 = vrot.lane.b32.xlu0 %v509, 80
      %v597 = vpop.permute.xlu0 %596
      %600 = vrot.lane.b32.xlu0 %v506, 96
      %v601 = vpop.permute.xlu0 %600
      %604 = vrot.lane.b32.xlu0 %v510, 112
      %v605 = vpop.permute.xlu0 %604
      %608 = vrot.lane.b32.xlu0 %v575, 16
      %v609 = vpop.permute.xlu0 %608
      %612 = vrot.lane.b32.xlu0 %v558, 32
      %v613 = vpop.permute.xlu0 %612
      %616 = vrot.lane.b32.xlu0 %v576, 48
      %v617 = vpop.permute.xlu0 %616
      %620 = vrot.lane.b32.xlu0 %v567, 64
      %v621 = vpop.permute.xlu0 %620
      %624 = vrot.lane.b32.xlu0 %v577, 80
      %v625 = vpop.permute.xlu0 %624
      %628 = vrot.lane.b32.xlu0 %v574, 96
      %v629 = vpop.permute.xlu0 %628
      %632 = vrot.lane.b32.xlu0 %v578, 112
      %v633 = vpop.permute.xlu0 %632
      %v635 = vsel %vm388, %v483, %v581
      %v636 = vsel %vm390, %v635, %v585
      %v637 = vsel %vm392, %v636, %v589
      %v638 = vsel %vm394, %v637, %v593
      %v639 = vsel %vm396, %v638, %v597
      %v640 = vsel %vm398, %v639, %v601
      %v641 = vsel %vm400, %v640, %v605
      %v642 = vsel %vm388, %v551, %v609
      %v643 = vsel %vm390, %v642, %v613
      %v644 = vsel %vm392, %v643, %v617
      %v645 = vsel %vm394, %v644, %v621
      %v646 = vsel %vm396, %v645, %v625
      %v647 = vsel %vm398, %v646, %v629
      %v648 = vsel %vm400, %v647, %v633
      %v651 = vrot.slane %v641, 4
      %v652 = vrot.slane %v648, 4
      %655 = vst [vmem:[#allocation2] sm:$0xf0] %v651
      %656 = vst [vmem:[#allocation2 + $0x8] sm:$0xf0] %v652
      %657 = vrot.lane.b32.xlu0 %v184, 126
      %v658 = vpop.permute.xlu0 %657
      %659 = vrot.lane.b32.xlu0 %v185, 126
      %v660 = vpop.permute.xlu0 %659
      %661 = vrot.lane.b32.xlu0 %v187, 126
      %v662 = vpop.permute.xlu0 %661
      %663 = vrot.lane.b32.xlu0 %v188, 126
      %v664 = vpop.permute.xlu0 %663
      %665 = vrot.lane.b32.xlu0 %v190, 126
      %v666 = vpop.permute.xlu0 %665
      %667 = vrot.lane.b32.xlu0 %v191, 126
      %v668 = vpop.permute.xlu0 %667
      %669 = vrot.lane.b32.xlu0 %v193, 126
      %v670 = vpop.permute.xlu0 %669
      %671 = vrot.lane.b32.xlu0 %v194, 126
      %v672 = vpop.permute.xlu0 %671
      %v681 = vcombine.low %v658, %v666
      %v682 = vcombine.high %v658, %v666
      %v684 = vunpack.c.l.s4 1983009808
      %v685 = vunpack.c.0.s8 %v684
      %v686 = vlaneseq
      %v687 = vshrl.u32 %v686, 7
      %v688 = vsub.s32 %v685, %v687
      %v689 = vrot.slane %v681, %v688
      %v691 = vunpack.c.l.s4 1983009808
      %v692 = vunpack.c.0.s8 %v691
      %v693 = vlaneseq
      %v694 = vshrl.u32 %v693, 7
      %v695 = vsub.s32 %v692, %v694
      %v696 = vrot.slane %v682, %v695
      %v697 = vcombine.low %v662, %v670
      %v698 = vcombine.high %v662, %v670
      %v700 = vunpack.c.l.s4 1983009808
      %v701 = vunpack.c.0.s8 %v700
      %v702 = vlaneseq
      %v703 = vshrl.u32 %v702, 7
      %v704 = vsub.s32 %v701, %v703
      %v705 = vrot.slane %v697, %v704
      %v707 = vunpack.c.l.s4 1983009808
      %v708 = vunpack.c.0.s8 %v707
      %v709 = vlaneseq
      %v710 = vshrl.u32 %v709, 7
      %v711 = vsub.s32 %v708, %v710
      %v712 = vrot.slane %v698, %v711
      %v713 = vcombine.low %v689, %v705
      %v714 = vcombine.high %v689, %v705
      %v716 = vunpack.c.l.s4 1934713408
      %v717 = vunpack.c.0.s8 %v716
      %v718 = vlaneseq
      %v719 = vshrl.u32 %v718, 7
      %v720 = vsub.s32 %v717, %v719
      %v721 = vrot.slane %v713, %v720
      %v723 = vunpack.c.l.s4 1934713408
      %v724 = vunpack.c.0.s8 %v723
      %v725 = vlaneseq
      %v726 = vshrl.u32 %v725, 7
      %v727 = vsub.s32 %v724, %v726
      %v728 = vrot.slane %v714, %v727
      %v729 = vcombine.low %v696, %v712
      %v730 = vcombine.high %v696, %v712
      %v732 = vunpack.c.l.s4 1934713408
      %v733 = vunpack.c.0.s8 %v732
      %v734 = vlaneseq
      %v735 = vshrl.u32 %v734, 7
      %v736 = vsub.s32 %v733, %v735
      %v737 = vrot.slane %v729, %v736
      %v739 = vunpack.c.l.s4 1934713408
      %v740 = vunpack.c.0.s8 %v739
      %v741 = vlaneseq
      %v742 = vshrl.u32 %v741, 7
      %v743 = vsub.s32 %v740, %v742
      %v744 = vrot.slane %v730, %v743
      %v745 = vcombine.high %v721, 0.0
      %v746 = vcombine.high %v728, 0.0
      %v747 = vcombine.high %v737, 0.0
      %v748 = vcombine.high %v744, 0.0
      %v749 = vcombine.low %v660, %v668
      %v750 = vcombine.high %v660, %v668
      %v752 = vunpack.c.l.s4 1983009808
      %v753 = vunpack.c.0.s8 %v752
      %v754 = vlaneseq
      %v755 = vshrl.u32 %v754, 7
      %v756 = vsub.s32 %v753, %v755
      %v757 = vrot.slane %v749, %v756
      %v759 = vunpack.c.l.s4 1983009808
      %v760 = vunpack.c.0.s8 %v759
      %v761 = vlaneseq
      %v762 = vshrl.u32 %v761, 7
      %v763 = vsub.s32 %v760, %v762
      %v764 = vrot.slane %v750, %v763
      %v765 = vcombine.low %v664, %v672
      %v766 = vcombine.high %v664, %v672
      %v768 = vunpack.c.l.s4 1983009808
      %v769 = vunpack.c.0.s8 %v768
      %v770 = vlaneseq
      %v771 = vshrl.u32 %v770, 7
      %v772 = vsub.s32 %v769, %v771
      %v773 = vrot.slane %v765, %v772
      %v775 = vunpack.c.l.s4 1983009808
      %v776 = vunpack.c.0.s8 %v775
      %v777 = vlaneseq
      %v778 = vshrl.u32 %v777, 7
      %v779 = vsub.s32 %v776, %v778
      %v780 = vrot.slane %v766, %v779
      %v781 = vcombine.low %v757, %v773
      %v782 = vcombine.high %v757, %v773
      %v784 = vunpack.c.l.s4 1934713408
      %v785 = vunpack.c.0.s8 %v784
      %v786 = vlaneseq
      %v787 = vshrl.u32 %v786, 7
      %v788 = vsub.s32 %v785, %v787
      %v789 = vrot.slane %v781, %v788
      %v791 = vunpack.c.l.s4 1934713408
      %v792 = vunpack.c.0.s8 %v791
      %v793 = vlaneseq
      %v794 = vshrl.u32 %v793, 7
      %v795 = vsub.s32 %v792, %v794
      %v796 = vrot.slane %v782, %v795
      %v797 = vcombine.low %v764, %v780
      %v798 = vcombine.high %v764, %v780
      %v800 = vunpack.c.l.s4 1934713408
      %v801 = vunpack.c.0.s8 %v800
      %v802 = vlaneseq
      %v803 = vshrl.u32 %v802, 7
      %v804 = vsub.s32 %v801, %v803
      %v805 = vrot.slane %v797, %v804
      %v807 = vunpack.c.l.s4 1934713408
      %v808 = vunpack.c.0.s8 %v807
      %v809 = vlaneseq
      %v810 = vshrl.u32 %v809, 7
      %v811 = vsub.s32 %v808, %v810
      %v812 = vrot.slane %v798, %v811
      %v813 = vcombine.high %v789, 0.0
      %v814 = vcombine.high %v796, 0.0
      %v815 = vcombine.high %v805, 0.0
      %v816 = vcombine.high %v812, 0.0
      %818 = vrot.lane.b32.xlu0 %v745, 16
      %v819 = vpop.permute.xlu0 %818
      %822 = vrot.lane.b32.xlu0 %v728, 32
      %v823 = vpop.permute.xlu0 %822
      %826 = vrot.lane.b32.xlu0 %v746, 48
      %v827 = vpop.permute.xlu0 %826
      %830 = vrot.lane.b32.xlu0 %v737, 64
      %v831 = vpop.permute.xlu0 %830
      %834 = vrot.lane.b32.xlu0 %v747, 80
      %v835 = vpop.permute.xlu0 %834
      %838 = vrot.lane.b32.xlu0 %v744, 96
      %v839 = vpop.permute.xlu0 %838
      %842 = vrot.lane.b32.xlu0 %v748, 112
      %v843 = vpop.permute.xlu0 %842
      %846 = vrot.lane.b32.xlu0 %v813, 16
      %v847 = vpop.permute.xlu0 %846
      %850 = vrot.lane.b32.xlu0 %v796, 32
      %v851 = vpop.permute.xlu0 %850
      %854 = vrot.lane.b32.xlu0 %v814, 48
      %v855 = vpop.permute.xlu0 %854
      %858 = vrot.lane.b32.xlu0 %v805, 64
      %v859 = vpop.permute.xlu0 %858
      %862 = vrot.lane.b32.xlu0 %v815, 80
      %v863 = vpop.permute.xlu0 %862
      %866 = vrot.lane.b32.xlu0 %v812, 96
      %v867 = vpop.permute.xlu0 %866
      %870 = vrot.lane.b32.xlu0 %v816, 112
      %v871 = vpop.permute.xlu0 %870
      %v873 = vsel %vm388, %v721, %v819
      %v874 = vsel %vm390, %v873, %v823
      %v875 = vsel %vm392, %v874, %v827
      %v876 = vsel %vm394, %v875, %v831
      %v877 = vsel %vm396, %v876, %v835
      %v878 = vsel %vm398, %v877, %v839
      %v879 = vsel %vm400, %v878, %v843
      %v880 = vsel %vm388, %v789, %v847
      %v881 = vsel %vm390, %v880, %v851
      %v882 = vsel %vm392, %v881, %v855
      %v883 = vsel %vm394, %v882, %v859
      %v884 = vsel %vm396, %v883, %v863
      %v885 = vsel %vm398, %v884, %v867
      %v886 = vsel %vm400, %v885, %v871
      %887 = vst [vmem:[#allocation2 + $0x10] sm:$0xf] %v879
      %888 = vst [vmem:[#allocation2 + $0x18] sm:$0xf] %v886
      %vm893 = vcmask 1046528
      %v894 = vrot.slane %v184, 1
      %v895 = vrot.slane %v185, 1
      %v896 = vsel %vm893, %v894, %v895
      %v897 = vrot.slane %v186, 1
      %v898 = vsel %vm893, %v895, %v897
      %v899 = vrot.slane %v187, 1
      %v900 = vrot.slane %v188, 1
      %v901 = vsel %vm893, %v899, %v900
      %v902 = vrot.slane %v189, 1
      %v903 = vsel %vm893, %v900, %v902
      %v904 = vrot.slane %v190, 1
      %v905 = vrot.slane %v191, 1
      %v906 = vsel %vm893, %v904, %v905
      %v907 = vrot.slane %v192, 1
      %v908 = vsel %vm893, %v905, %v907
      %v909 = vrot.slane %v193, 1
      %v910 = vrot.slane %v194, 1
      %v911 = vsel %vm893, %v909, %v910
      %v912 = vrot.slane %v195, 1
      %v913 = vsel %vm893, %v910, %v912
      %v922 = vcombine.low %v896, %v906
      %v923 = vcombine.high %v896, %v906
      %v925 = vunpack.c.l.s4 1983009808
      %v926 = vunpack.c.0.s8 %v925
      %v927 = vlaneseq
      %v928 = vshrl.u32 %v927, 7
      %v929 = vsub.s32 %v926, %v928
      %v930 = vrot.slane %v922, %v929
      %v932 = vunpack.c.l.s4 1983009808
      %v933 = vunpack.c.0.s8 %v932
      %v934 = vlaneseq
      %v935 = vshrl.u32 %v934, 7
      %v936 = vsub.s32 %v933, %v935
      %v937 = vrot.slane %v923, %v936
      %v938 = vcombine.low %v901, %v911
      %v939 = vcombine.high %v901, %v911
      %v941 = vunpack.c.l.s4 1983009808
      %v942 = vunpack.c.0.s8 %v941
      %v943 = vlaneseq
      %v944 = vshrl.u32 %v943, 7
      %v945 = vsub.s32 %v942, %v944
      %v946 = vrot.slane %v938, %v945
      %v948 = vunpack.c.l.s4 1983009808
      %v949 = vunpack.c.0.s8 %v948
      %v950 = vlaneseq
      %v951 = vshrl.u32 %v950, 7
      %v952 = vsub.s32 %v949, %v951
      %v953 = vrot.slane %v939, %v952
      %v954 = vcombine.low %v930, %v946
      %v955 = vcombine.high %v930, %v946
      %v957 = vunpack.c.l.s4 1934713408
      %v958 = vunpack.c.0.s8 %v957
      %v959 = vlaneseq
      %v960 = vshrl.u32 %v959, 7
      %v961 = vsub.s32 %v958, %v960
      %v962 = vrot.slane %v954, %v961
      %v964 = vunpack.c.l.s4 1934713408
      %v965 = vunpack.c.0.s8 %v964
      %v966 = vlaneseq
      %v967 = vshrl.u32 %v966, 7
      %v968 = vsub.s32 %v965, %v967
      %v969 = vrot.slane %v955, %v968
      %v970 = vcombine.low %v937, %v953
      %v971 = vcombine.high %v937, %v953
      %v973 = vunpack.c.l.s4 1934713408
      %v974 = vunpack.c.0.s8 %v973
      %v975 = vlaneseq
      %v976 = vshrl.u32 %v975, 7
      %v977 = vsub.s32 %v974, %v976
      %v978 = vrot.slane %v970, %v977
      %v980 = vunpack.c.l.s4 1934713408
      %v981 = vunpack.c.0.s8 %v980
      %v982 = vlaneseq
      %v983 = vshrl.u32 %v982, 7
      %v984 = vsub.s32 %v981, %v983
      %v985 = vrot.slane %v971, %v984
      %v986 = vcombine.high %v962, 0.0
      %v987 = vcombine.high %v969, 0.0
      %v988 = vcombine.high %v978, 0.0
      %v989 = vcombine.high %v985, 0.0
      %v990 = vcombine.low %v898, %v908
      %v991 = vcombine.high %v898, %v908
      %v993 = vunpack.c.l.s4 1983009808
      %v994 = vunpack.c.0.s8 %v993
      %v995 = vlaneseq
      %v996 = vshrl.u32 %v995, 7
      %v997 = vsub.s32 %v994, %v996
      %v998 = vrot.slane %v990, %v997
      %v1000 = vunpack.c.l.s4 1983009808
      %v1001 = vunpack.c.0.s8 %v1000
      %v1002 = vlaneseq
      %v1003 = vshrl.u32 %v1002, 7
      %v1004 = vsub.s32 %v1001, %v1003
      %v1005 = vrot.slane %v991, %v1004
      %v1006 = vcombine.low %v903, %v913
      %v1007 = vcombine.high %v903, %v913
      %v1009 = vunpack.c.l.s4 1983009808
      %v1010 = vunpack.c.0.s8 %v1009
      %v1011 = vlaneseq
      %v1012 = vshrl.u32 %v1011, 7
      %v1013 = vsub.s32 %v1010, %v1012
      %v1014 = vrot.slane %v1006, %v1013
      %v1016 = vunpack.c.l.s4 1983009808
      %v1017 = vunpack.c.0.s8 %v1016
      %v1018 = vlaneseq
      %v1019 = vshrl.u32 %v1018, 7
      %v1020 = vsub.s32 %v1017, %v1019
      %v1021 = vrot.slane %v1007, %v1020
      %v1022 = vcombine.low %v998, %v1014
      %v1023 = vcombine.high %v998, %v1014
      %v1025 = vunpack.c.l.s4 1934713408
      %v1026 = vunpack.c.0.s8 %v1025
      %v1027 = vlaneseq
      %v1028 = vshrl.u32 %v1027, 7
      %v1029 = vsub.s32 %v1026, %v1028
      %v1030 = vrot.slane %v1022, %v1029
      %v1032 = vunpack.c.l.s4 1934713408
      %v1033 = vunpack.c.0.s8 %v1032
      %v1034 = vlaneseq
      %v1035 = vshrl.u32 %v1034, 7
      %v1036 = vsub.s32 %v1033, %v1035
      %v1037 = vrot.slane %v1023, %v1036
      %v1038 = vcombine.low %v1005, %v1021
      %v1039 = vcombine.high %v1005, %v1021
      %v1041 = vunpack.c.l.s4 1934713408
      %v1042 = vunpack.c.0.s8 %v1041
      %v1043 = vlaneseq
      %v1044 = vshrl.u32 %v1043, 7
      %v1045 = vsub.s32 %v1042, %v1044
      %v1046 = vrot.slane %v1038, %v1045
      %v1048 = vunpack.c.l.s4 1934713408
      %v1049 = vunpack.c.0.s8 %v1048
      %v1050 = vlaneseq
      %v1051 = vshrl.u32 %v1050, 7
      %v1052 = vsub.s32 %v1049, %v1051
      %v1053 = vrot.slane %v1039, %v1052
      %v1054 = vcombine.high %v1030, 0.0
      %v1055 = vcombine.high %v1037, 0.0
      %v1056 = vcombine.high %v1046, 0.0
      %v1057 = vcombine.high %v1053, 0.0
      %1059 = vrot.lane.b32.xlu0 %v986, 16
      %v1060 = vpop.permute.xlu0 %1059
      %1063 = vrot.lane.b32.xlu0 %v969, 32
      %v1064 = vpop.permute.xlu0 %1063
      %1067 = vrot.lane.b32.xlu0 %v987, 48
      %v1068 = vpop.permute.xlu0 %1067
      %1071 = vrot.lane.b32.xlu0 %v978, 64
      %v1072 = vpop.permute.xlu0 %1071
      %1075 = vrot.lane.b32.xlu0 %v988, 80
      %v1076 = vpop.permute.xlu0 %1075
      %1079 = vrot.lane.b32.xlu0 %v985, 96
      %v1080 = vpop.permute.xlu0 %1079
      %1083 = vrot.lane.b32.xlu0 %v989, 112
      %v1084 = vpop.permute.xlu0 %1083
      %1087 = vrot.lane.b32.xlu0 %v1054, 16
      %v1088 = vpop.permute.xlu0 %1087
      %1091 = vrot.lane.b32.xlu0 %v1037, 32
      %v1092 = vpop.permute.xlu0 %1091
      %1095 = vrot.lane.b32.xlu0 %v1055, 48
      %v1096 = vpop.permute.xlu0 %1095
      %1099 = vrot.lane.b32.xlu0 %v1046, 64
      %v1100 = vpop.permute.xlu0 %1099
      %1103 = vrot.lane.b32.xlu0 %v1056, 80
      %v1104 = vpop.permute.xlu0 %1103
      %1107 = vrot.lane.b32.xlu0 %v1053, 96
      %v1108 = vpop.permute.xlu0 %1107
      %1111 = vrot.lane.b32.xlu0 %v1057, 112
      %v1112 = vpop.permute.xlu0 %1111
      %v1114 = vsel %vm388, %v962, %v1060
      %v1115 = vsel %vm390, %v1114, %v1064
      %v1116 = vsel %vm392, %v1115, %v1068
      %v1117 = vsel %vm394, %v1116, %v1072
      %v1118 = vsel %vm396, %v1117, %v1076
      %v1119 = vsel %vm398, %v1118, %v1080
      %v1120 = vsel %vm400, %v1119, %v1084
      %v1121 = vsel %vm388, %v1030, %v1088
      %v1122 = vsel %vm390, %v1121, %v1092
      %v1123 = vsel %vm392, %v1122, %v1096
      %v1124 = vsel %vm394, %v1123, %v1100
      %v1125 = vsel %vm396, %v1124, %v1104
      %v1126 = vsel %vm398, %v1125, %v1108
      %v1127 = vsel %vm400, %v1126, %v1112
      %v1130 = vrot.slane %v1120, 4
      %v1131 = vrot.slane %v1127, 4
      %1134 = vst [vmem:[#allocation2 + $0x10] sm:$0xf0] %v1130
      %1135 = vst [vmem:[#allocation2 + $0x18] sm:$0xf0] %v1131
      %1136 = vrot.lane.b32.xlu0 %v896, 127
      %v1137 = vpop.permute.xlu0 %1136
      %1138 = vrot.lane.b32.xlu0 %v898, 127
      %v1139 = vpop.permute.xlu0 %1138
      %1140 = vrot.lane.b32.xlu0 %v901, 127
      %v1141 = vpop.permute.xlu0 %1140
      %1142 = vrot.lane.b32.xlu0 %v903, 127
      %v1143 = vpop.permute.xlu0 %1142
      %1144 = vrot.lane.b32.xlu0 %v906, 127
      %v1145 = vpop.permute.xlu0 %1144
      %1146 = vrot.lane.b32.xlu0 %v908, 127
      %v1147 = vpop.permute.xlu0 %1146
      %1148 = vrot.lane.b32.xlu0 %v911, 127
      %v1149 = vpop.permute.xlu0 %1148
      %1150 = vrot.lane.b32.xlu0 %v913, 127
      %v1151 = vpop.permute.xlu0 %1150
      %v1160 = vcombine.low %v1137, %v1145
      %v1161 = vcombine.high %v1137, %v1145
      %v1163 = vunpack.c.l.s4 1983009808
      %v1164 = vunpack.c.0.s8 %v1163
      %v1165 = vlaneseq
      %v1166 = vshrl.u32 %v1165, 7
      %v1167 = vsub.s32 %v1164, %v1166
      %v1168 = vrot.slane %v1160, %v1167
      %v1170 = vunpack.c.l.s4 1983009808
      %v1171 = vunpack.c.0.s8 %v1170
      %v1172 = vlaneseq
      %v1173 = vshrl.u32 %v1172, 7
      %v1174 = vsub.s32 %v1171, %v1173
      %v1175 = vrot.slane %v1161, %v1174
      %v1176 = vcombine.low %v1141, %v1149
      %v1177 = vcombine.high %v1141, %v1149
      %v1179 = vunpack.c.l.s4 1983009808
      %v1180 = vunpack.c.0.s8 %v1179
      %v1181 = vlaneseq
      %v1182 = vshrl.u32 %v1181, 7
      %v1183 = vsub.s32 %v1180, %v1182
      %v1184 = vrot.slane %v1176, %v1183
      %v1186 = vunpack.c.l.s4 1983009808
      %v1187 = vunpack.c.0.s8 %v1186
      %v1188 = vlaneseq
      %v1189 = vshrl.u32 %v1188, 7
      %v1190 = vsub.s32 %v1187, %v1189
      %v1191 = vrot.slane %v1177, %v1190
      %v1192 = vcombine.low %v1168, %v1184
      %v1193 = vcombine.high %v1168, %v1184
      %v1195 = vunpack.c.l.s4 1934713408
      %v1196 = vunpack.c.0.s8 %v1195
      %v1197 = vlaneseq
      %v1198 = vshrl.u32 %v1197, 7
      %v1199 = vsub.s32 %v1196, %v1198
      %v1200 = vrot.slane %v1192, %v1199
      %v1202 = vunpack.c.l.s4 1934713408
      %v1203 = vunpack.c.0.s8 %v1202
      %v1204 = vlaneseq
      %v1205 = vshrl.u32 %v1204, 7
      %v1206 = vsub.s32 %v1203, %v1205
      %v1207 = vrot.slane %v1193, %v1206
      %v1208 = vcombine.low %v1175, %v1191
      %v1209 = vcombine.high %v1175, %v1191
      %v1211 = vunpack.c.l.s4 1934713408
      %v1212 = vunpack.c.0.s8 %v1211
      %v1213 = vlaneseq
      %v1214 = vshrl.u32 %v1213, 7
      %v1215 = vsub.s32 %v1212, %v1214
      %v1216 = vrot.slane %v1208, %v1215
      %v1218 = vunpack.c.l.s4 1934713408
      %v1219 = vunpack.c.0.s8 %v1218
      %v1220 = vlaneseq
      %v1221 = vshrl.u32 %v1220, 7
      %v1222 = vsub.s32 %v1219, %v1221
      %v1223 = vrot.slane %v1209, %v1222
      %v1224 = vcombine.high %v1200, 0.0
      %v1225 = vcombine.high %v1207, 0.0
      %v1226 = vcombine.high %v1216, 0.0
      %v1227 = vcombine.high %v1223, 0.0
      %v1228 = vcombine.low %v1139, %v1147
      %v1229 = vcombine.high %v1139, %v1147
      %v1231 = vunpack.c.l.s4 1983009808
      %v1232 = vunpack.c.0.s8 %v1231
      %v1233 = vlaneseq
      %v1234 = vshrl.u32 %v1233, 7
      %v1235 = vsub.s32 %v1232, %v1234
      %v1236 = vrot.slane %v1228, %v1235
      %v1238 = vunpack.c.l.s4 1983009808
      %v1239 = vunpack.c.0.s8 %v1238
      %v1240 = vlaneseq
      %v1241 = vshrl.u32 %v1240, 7
      %v1242 = vsub.s32 %v1239, %v1241
      %v1243 = vrot.slane %v1229, %v1242
      %v1244 = vcombine.low %v1143, %v1151
      %v1245 = vcombine.high %v1143, %v1151
      %v1247 = vunpack.c.l.s4 1983009808
      %v1248 = vunpack.c.0.s8 %v1247
      %v1249 = vlaneseq
      %v1250 = vshrl.u32 %v1249, 7
      %v1251 = vsub.s32 %v1248, %v1250
      %v1252 = vrot.slane %v1244, %v1251
      %v1254 = vunpack.c.l.s4 1983009808
      %v1255 = vunpack.c.0.s8 %v1254
      %v1256 = vlaneseq
      %v1257 = vshrl.u32 %v1256, 7
      %v1258 = vsub.s32 %v1255, %v1257
      %v1259 = vrot.slane %v1245, %v1258
      %v1260 = vcombine.low %v1236, %v1252
      %v1261 = vcombine.high %v1236, %v1252
      %v1263 = vunpack.c.l.s4 1934713408
      %v1264 = vunpack.c.0.s8 %v1263
      %v1265 = vlaneseq
      %v1266 = vshrl.u32 %v1265, 7
      %v1267 = vsub.s32 %v1264, %v1266
      %v1268 = vrot.slane %v1260, %v1267
      %v1270 = vunpack.c.l.s4 1934713408
      %v1271 = vunpack.c.0.s8 %v1270
      %v1272 = vlaneseq
      %v1273 = vshrl.u32 %v1272, 7
      %v1274 = vsub.s32 %v1271, %v1273
      %v1275 = vrot.slane %v1261, %v1274
      %v1276 = vcombine.low %v1243, %v1259
      %v1277 = vcombine.high %v1243, %v1259
      %v1279 = vunpack.c.l.s4 1934713408
      %v1280 = vunpack.c.0.s8 %v1279
      %v1281 = vlaneseq
      %v1282 = vshrl.u32 %v1281, 7
      %v1283 = vsub.s32 %v1280, %v1282
      %v1284 = vrot.slane %v1276, %v1283
      %v1286 = vunpack.c.l.s4 1934713408
      %v1287 = vunpack.c.0.s8 %v1286
      %v1288 = vlaneseq
      %v1289 = vshrl.u32 %v1288, 7
      %v1290 = vsub.s32 %v1287, %v1289
      %v1291 = vrot.slane %v1277, %v1290
      %v1292 = vcombine.high %v1268, 0.0
      %v1293 = vcombine.high %v1275, 0.0
      %v1294 = vcombine.high %v1284, 0.0
      %v1295 = vcombine.high %v1291, 0.0
      %1297 = vrot.lane.b32.xlu0 %v1224, 16
      %v1298 = vpop.permute.xlu0 %1297
      %1301 = vrot.lane.b32.xlu0 %v1207, 32
      %v1302 = vpop.permute.xlu0 %1301
      %1305 = vrot.lane.b32.xlu0 %v1225, 48
      %v1306 = vpop.permute.xlu0 %1305
      %1309 = vrot.lane.b32.xlu0 %v1216, 64
      %v1310 = vpop.permute.xlu0 %1309
      %1313 = vrot.lane.b32.xlu0 %v1226, 80
      %v1314 = vpop.permute.xlu0 %1313
      %1317 = vrot.lane.b32.xlu0 %v1223, 96
      %v1318 = vpop.permute.xlu0 %1317
      %1321 = vrot.lane.b32.xlu0 %v1227, 112
      %v1322 = vpop.permute.xlu0 %1321
      %1325 = vrot.lane.b32.xlu0 %v1292, 16
      %v1326 = vpop.permute.xlu0 %1325
      %1329 = vrot.lane.b32.xlu0 %v1275, 32
      %v1330 = vpop.permute.xlu0 %1329
      %1333 = vrot.lane.b32.xlu0 %v1293, 48
      %v1334 = vpop.permute.xlu0 %1333
      %1337 = vrot.lane.b32.xlu0 %v1284, 64
      %v1338 = vpop.permute.xlu0 %1337
      %1341 = vrot.lane.b32.xlu0 %v1294, 80
      %v1342 = vpop.permute.xlu0 %1341
      %1345 = vrot.lane.b32.xlu0 %v1291, 96
      %v1346 = vpop.permute.xlu0 %1345
      %1349 = vrot.lane.b32.xlu0 %v1295, 112
      %v1350 = vpop.permute.xlu0 %1349
      %v1352 = vsel %vm388, %v1200, %v1298
      %v1353 = vsel %vm390, %v1352, %v1302
      %v1354 = vsel %vm392, %v1353, %v1306
      %v1355 = vsel %vm394, %v1354, %v1310
      %v1356 = vsel %vm396, %v1355, %v1314
      %v1357 = vsel %vm398, %v1356, %v1318
      %v1358 = vsel %vm400, %v1357, %v1322
      %v1359 = vsel %vm388, %v1268, %v1326
      %v1360 = vsel %vm390, %v1359, %v1330
      %v1361 = vsel %vm392, %v1360, %v1334
      %v1362 = vsel %vm394, %v1361, %v1338
      %v1363 = vsel %vm396, %v1362, %v1342
      %v1364 = vsel %vm398, %v1363, %v1346
      %v1365 = vsel %vm400, %v1364, %v1350
      %1366 = vst [vmem:[#allocation2 + $0x20] sm:$0xf] %v1358
      %1367 = vst [vmem:[#allocation2 + $0x28] sm:$0xf] %v1365
      %1368 = vrot.lane.b32.xlu0 %v896, 126
      %v1369 = vpop.permute.xlu0 %1368
      %1370 = vrot.lane.b32.xlu0 %v898, 126
      %v1371 = vpop.permute.xlu0 %1370
      %1372 = vrot.lane.b32.xlu0 %v901, 126
      %v1373 = vpop.permute.xlu0 %1372
      %1374 = vrot.lane.b32.xlu0 %v903, 126
      %v1375 = vpop.permute.xlu0 %1374
      %1376 = vrot.lane.b32.xlu0 %v906, 126
      %v1377 = vpop.permute.xlu0 %1376
      %1378 = vrot.lane.b32.xlu0 %v908, 126
      %v1379 = vpop.permute.xlu0 %1378
      %1380 = vrot.lane.b32.xlu0 %v911, 126
      %v1381 = vpop.permute.xlu0 %1380
      %1382 = vrot.lane.b32.xlu0 %v913, 126
      %v1383 = vpop.permute.xlu0 %1382
      %v1392 = vcombine.low %v1369, %v1377
      %v1393 = vcombine.high %v1369, %v1377
      %v1395 = vunpack.c.l.s4 1983009808
      %v1396 = vunpack.c.0.s8 %v1395
      %v1397 = vlaneseq
      %v1398 = vshrl.u32 %v1397, 7
      %v1399 = vsub.s32 %v1396, %v1398
      %v1400 = vrot.slane %v1392, %v1399
      %v1402 = vunpack.c.l.s4 1983009808
      %v1403 = vunpack.c.0.s8 %v1402
      %v1404 = vlaneseq
      %v1405 = vshrl.u32 %v1404, 7
      %v1406 = vsub.s32 %v1403, %v1405
      %v1407 = vrot.slane %v1393, %v1406
      %v1408 = vcombine.low %v1373, %v1381
      %v1409 = vcombine.high %v1373, %v1381
      %v1411 = vunpack.c.l.s4 1983009808
      %v1412 = vunpack.c.0.s8 %v1411
      %v1413 = vlaneseq
      %v1414 = vshrl.u32 %v1413, 7
      %v1415 = vsub.s32 %v1412, %v1414
      %v1416 = vrot.slane %v1408, %v1415
      %v1418 = vunpack.c.l.s4 1983009808
      %v1419 = vunpack.c.0.s8 %v1418
      %v1420 = vlaneseq
      %v1421 = vshrl.u32 %v1420, 7
      %v1422 = vsub.s32 %v1419, %v1421
      %v1423 = vrot.slane %v1409, %v1422
      %v1424 = vcombine.low %v1400, %v1416
      %v1425 = vcombine.high %v1400, %v1416
      %v1427 = vunpack.c.l.s4 1934713408
      %v1428 = vunpack.c.0.s8 %v1427
      %v1429 = vlaneseq
      %v1430 = vshrl.u32 %v1429, 7
      %v1431 = vsub.s32 %v1428, %v1430
      %v1432 = vrot.slane %v1424, %v1431
      %v1434 = vunpack.c.l.s4 1934713408
      %v1435 = vunpack.c.0.s8 %v1434
      %v1436 = vlaneseq
      %v1437 = vshrl.u32 %v1436, 7
      %v1438 = vsub.s32 %v1435, %v1437
      %v1439 = vrot.slane %v1425, %v1438
      %v1440 = vcombine.low %v1407, %v1423
      %v1441 = vcombine.high %v1407, %v1423
      %v1443 = vunpack.c.l.s4 1934713408
      %v1444 = vunpack.c.0.s8 %v1443
      %v1445 = vlaneseq
      %v1446 = vshrl.u32 %v1445, 7
      %v1447 = vsub.s32 %v1444, %v1446
      %v1448 = vrot.slane %v1440, %v1447
      %v1450 = vunpack.c.l.s4 1934713408
      %v1451 = vunpack.c.0.s8 %v1450
      %v1452 = vlaneseq
      %v1453 = vshrl.u32 %v1452, 7
      %v1454 = vsub.s32 %v1451, %v1453
      %v1455 = vrot.slane %v1441, %v1454
      %v1456 = vcombine.high %v1432, 0.0
      %v1457 = vcombine.high %v1439, 0.0
      %v1458 = vcombine.high %v1448, 0.0
      %v1459 = vcombine.high %v1455, 0.0
      %v1460 = vcombine.low %v1371, %v1379
      %v1461 = vcombine.high %v1371, %v1379
      %v1463 = vunpack.c.l.s4 1983009808
      %v1464 = vunpack.c.0.s8 %v1463
      %v1465 = vlaneseq
      %v1466 = vshrl.u32 %v1465, 7
      %v1467 = vsub.s32 %v1464, %v1466
      %v1468 = vrot.slane %v1460, %v1467
      %v1470 = vunpack.c.l.s4 1983009808
      %v1471 = vunpack.c.0.s8 %v1470
      %v1472 = vlaneseq
      %v1473 = vshrl.u32 %v1472, 7
      %v1474 = vsub.s32 %v1471, %v1473
      %v1475 = vrot.slane %v1461, %v1474
      %v1476 = vcombine.low %v1375, %v1383
      %v1477 = vcombine.high %v1375, %v1383
      %v1479 = vunpack.c.l.s4 1983009808
      %v1480 = vunpack.c.0.s8 %v1479
      %v1481 = vlaneseq
      %v1482 = vshrl.u32 %v1481, 7
      %v1483 = vsub.s32 %v1480, %v1482
      %v1484 = vrot.slane %v1476, %v1483
      %v1486 = vunpack.c.l.s4 1983009808
      %v1487 = vunpack.c.0.s8 %v1486
      %v1488 = vlaneseq
      %v1489 = vshrl.u32 %v1488, 7
      %v1490 = vsub.s32 %v1487, %v1489
      %v1491 = vrot.slane %v1477, %v1490
      %v1492 = vcombine.low %v1468, %v1484
      %v1493 = vcombine.high %v1468, %v1484
      %v1495 = vunpack.c.l.s4 1934713408
      %v1496 = vunpack.c.0.s8 %v1495
      %v1497 = vlaneseq
      %v1498 = vshrl.u32 %v1497, 7
      %v1499 = vsub.s32 %v1496, %v1498
      %v1500 = vrot.slane %v1492, %v1499
      %v1502 = vunpack.c.l.s4 1934713408
      %v1503 = vunpack.c.0.s8 %v1502
      %v1504 = vlaneseq
      %v1505 = vshrl.u32 %v1504, 7
      %v1506 = vsub.s32 %v1503, %v1505
      %v1507 = vrot.slane %v1493, %v1506
      %v1508 = vcombine.low %v1475, %v1491
      %v1509 = vcombine.high %v1475, %v1491
      %v1511 = vunpack.c.l.s4 1934713408
      %v1512 = vunpack.c.0.s8 %v1511
      %v1513 = vlaneseq
      %v1514 = vshrl.u32 %v1513, 7
      %v1515 = vsub.s32 %v1512, %v1514
      %v1516 = vrot.slane %v1508, %v1515
      %v1518 = vunpack.c.l.s4 1934713408
      %v1519 = vunpack.c.0.s8 %v1518
      %v1520 = vlaneseq
      %v1521 = vshrl.u32 %v1520, 7
      %v1522 = vsub.s32 %v1519, %v1521
      %v1523 = vrot.slane %v1509, %v1522
      %v1524 = vcombine.high %v1500, 0.0
      %v1525 = vcombine.high %v1507, 0.0
      %v1526 = vcombine.high %v1516, 0.0
      %v1527 = vcombine.high %v1523, 0.0
      %1529 = vrot.lane.b32.xlu0 %v1456, 16
      %v1530 = vpop.permute.xlu0 %1529
      %1533 = vrot.lane.b32.xlu0 %v1439, 32
      %v1534 = vpop.permute.xlu0 %1533
      %1537 = vrot.lane.b32.xlu0 %v1457, 48
      %v1538 = vpop.permute.xlu0 %1537
      %1541 = vrot.lane.b32.xlu0 %v1448, 64
      %v1542 = vpop.permute.xlu0 %1541
      %1545 = vrot.lane.b32.xlu0 %v1458, 80
      %v1546 = vpop.permute.xlu0 %1545
      %1549 = vrot.lane.b32.xlu0 %v1455, 96
      %v1550 = vpop.permute.xlu0 %1549
      %1553 = vrot.lane.b32.xlu0 %v1459, 112
      %v1554 = vpop.permute.xlu0 %1553
      %1557 = vrot.lane.b32.xlu0 %v1524, 16
      %v1558 = vpop.permute.xlu0 %1557
      %1561 = vrot.lane.b32.xlu0 %v1507, 32
      %v1562 = vpop.permute.xlu0 %1561
      %1565 = vrot.lane.b32.xlu0 %v1525, 48
      %v1566 = vpop.permute.xlu0 %1565
      %1569 = vrot.lane.b32.xlu0 %v1516, 64
      %v1570 = vpop.permute.xlu0 %1569
      %1573 = vrot.lane.b32.xlu0 %v1526, 80
      %v1574 = vpop.permute.xlu0 %1573
      %1577 = vrot.lane.b32.xlu0 %v1523, 96
      %v1578 = vpop.permute.xlu0 %1577
      %1581 = vrot.lane.b32.xlu0 %v1527, 112
      %v1582 = vpop.permute.xlu0 %1581
      %v1584 = vsel %vm388, %v1432, %v1530
      %v1585 = vsel %vm390, %v1584, %v1534
      %v1586 = vsel %vm392, %v1585, %v1538
      %v1587 = vsel %vm394, %v1586, %v1542
      %v1588 = vsel %vm396, %v1587, %v1546
      %v1589 = vsel %vm398, %v1588, %v1550
      %v1590 = vsel %vm400, %v1589, %v1554
      %v1591 = vsel %vm388, %v1500, %v1558
      %v1592 = vsel %vm390, %v1591, %v1562
      %v1593 = vsel %vm392, %v1592, %v1566
      %v1594 = vsel %vm394, %v1593, %v1570
      %v1595 = vsel %vm396, %v1594, %v1574
      %v1596 = vsel %vm398, %v1595, %v1578
      %v1597 = vsel %vm400, %v1596, %v1582
      %v1600 = vrot.slane %v1590, 4
      %v1601 = vrot.slane %v1597, 4
      %1604 = vst [vmem:[#allocation2 + $0x20] sm:$0xf0] %v1600
      %1605 = vst [vmem:[#allocation2 + $0x28] sm:$0xf0] %v1601
      %vm1606 = vcmask 1045504
      %v1607 = vrot.slane %v184, 2
      %v1608 = vrot.slane %v185, 2
      %v1609 = vsel %vm1606, %v1607, %v1608
      %v1610 = vrot.slane %v186, 2
      %v1611 = vsel %vm1606, %v1608, %v1610
      %v1612 = vrot.slane %v187, 2
      %v1613 = vrot.slane %v188, 2
      %v1614 = vsel %vm1606, %v1612, %v1613
      %v1615 = vrot.slane %v189, 2
      %v1616 = vsel %vm1606, %v1613, %v1615
      %v1617 = vrot.slane %v190, 2
      %v1618 = vrot.slane %v191, 2
      %v1619 = vsel %vm1606, %v1617, %v1618
      %v1620 = vrot.slane %v192, 2
      %v1621 = vsel %vm1606, %v1618, %v1620
      %v1622 = vrot.slane %v193, 2
      %v1623 = vrot.slane %v194, 2
      %v1624 = vsel %vm1606, %v1622, %v1623
      %v1625 = vrot.slane %v195, 2
      %v1626 = vsel %vm1606, %v1623, %v1625
      %v1635 = vcombine.low %v1609, %v1619
      %v1636 = vcombine.high %v1609, %v1619
      %v1638 = vunpack.c.l.s4 1983009808
      %v1639 = vunpack.c.0.s8 %v1638
      %v1640 = vlaneseq
      %v1641 = vshrl.u32 %v1640, 7
      %v1642 = vsub.s32 %v1639, %v1641
      %v1643 = vrot.slane %v1635, %v1642
      %v1645 = vunpack.c.l.s4 1983009808
      %v1646 = vunpack.c.0.s8 %v1645
      %v1647 = vlaneseq
      %v1648 = vshrl.u32 %v1647, 7
      %v1649 = vsub.s32 %v1646, %v1648
      %v1650 = vrot.slane %v1636, %v1649
      %v1651 = vcombine.low %v1614, %v1624
      %v1652 = vcombine.high %v1614, %v1624
      %v1654 = vunpack.c.l.s4 1983009808
      %v1655 = vunpack.c.0.s8 %v1654
      %v1656 = vlaneseq
      %v1657 = vshrl.u32 %v1656, 7
      %v1658 = vsub.s32 %v1655, %v1657
      %v1659 = vrot.slane %v1651, %v1658
      %v1661 = vunpack.c.l.s4 1983009808
      %v1662 = vunpack.c.0.s8 %v1661
      %v1663 = vlaneseq
      %v1664 = vshrl.u32 %v1663, 7
      %v1665 = vsub.s32 %v1662, %v1664
      %v1666 = vrot.slane %v1652, %v1665
      %v1667 = vcombine.low %v1643, %v1659
      %v1668 = vcombine.high %v1643, %v1659
      %v1670 = vunpack.c.l.s4 1934713408
      %v1671 = vunpack.c.0.s8 %v1670
      %v1672 = vlaneseq
      %v1673 = vshrl.u32 %v1672, 7
      %v1674 = vsub.s32 %v1671, %v1673
      %v1675 = vrot.slane %v1667, %v1674
      %v1677 = vunpack.c.l.s4 1934713408
      %v1678 = vunpack.c.0.s8 %v1677
      %v1679 = vlaneseq
      %v1680 = vshrl.u32 %v1679, 7
      %v1681 = vsub.s32 %v1678, %v1680
      %v1682 = vrot.slane %v1668, %v1681
      %v1683 = vcombine.low %v1650, %v1666
      %v1684 = vcombine.high %v1650, %v1666
      %v1686 = vunpack.c.l.s4 1934713408
      %v1687 = vunpack.c.0.s8 %v1686
      %v1688 = vlaneseq
      %v1689 = vshrl.u32 %v1688, 7
      %v1690 = vsub.s32 %v1687, %v1689
      %v1691 = vrot.slane %v1683, %v1690
      %v1693 = vunpack.c.l.s4 1934713408
      %v1694 = vunpack.c.0.s8 %v1693
      %v1695 = vlaneseq
      %v1696 = vshrl.u32 %v1695, 7
      %v1697 = vsub.s32 %v1694, %v1696
      %v1698 = vrot.slane %v1684, %v1697
      %v1699 = vcombine.high %v1675, 0.0
      %v1700 = vcombine.high %v1682, 0.0
      %v1701 = vcombine.high %v1691, 0.0
      %v1702 = vcombine.high %v1698, 0.0
      %v1703 = vcombine.low %v1611, %v1621
      %v1704 = vcombine.high %v1611, %v1621
      %v1706 = vunpack.c.l.s4 1983009808
      %v1707 = vunpack.c.0.s8 %v1706
      %v1708 = vlaneseq
      %v1709 = vshrl.u32 %v1708, 7
      %v1710 = vsub.s32 %v1707, %v1709
      %v1711 = vrot.slane %v1703, %v1710
      %v1713 = vunpack.c.l.s4 1983009808
      %v1714 = vunpack.c.0.s8 %v1713
      %v1715 = vlaneseq
      %v1716 = vshrl.u32 %v1715, 7
      %v1717 = vsub.s32 %v1714, %v1716
      %v1718 = vrot.slane %v1704, %v1717
      %v1719 = vcombine.low %v1616, %v1626
      %v1720 = vcombine.high %v1616, %v1626
      %v1722 = vunpack.c.l.s4 1983009808
      %v1723 = vunpack.c.0.s8 %v1722
      %v1724 = vlaneseq
      %v1725 = vshrl.u32 %v1724, 7
      %v1726 = vsub.s32 %v1723, %v1725
      %v1727 = vrot.slane %v1719, %v1726
      %v1729 = vunpack.c.l.s4 1983009808
      %v1730 = vunpack.c.0.s8 %v1729
      %v1731 = vlaneseq
      %v1732 = vshrl.u32 %v1731, 7
      %v1733 = vsub.s32 %v1730, %v1732
      %v1734 = vrot.slane %v1720, %v1733
      %v1735 = vcombine.low %v1711, %v1727
      %v1736 = vcombine.high %v1711, %v1727
      %v1738 = vunpack.c.l.s4 1934713408
      %v1739 = vunpack.c.0.s8 %v1738
      %v1740 = vlaneseq
      %v1741 = vshrl.u32 %v1740, 7
      %v1742 = vsub.s32 %v1739, %v1741
      %v1743 = vrot.slane %v1735, %v1742
      %v1745 = vunpack.c.l.s4 1934713408
      %v1746 = vunpack.c.0.s8 %v1745
      %v1747 = vlaneseq
      %v1748 = vshrl.u32 %v1747, 7
      %v1749 = vsub.s32 %v1746, %v1748
      %v1750 = vrot.slane %v1736, %v1749
      %v1751 = vcombine.low %v1718, %v1734
      %v1752 = vcombine.high %v1718, %v1734
      %v1754 = vunpack.c.l.s4 1934713408
      %v1755 = vunpack.c.0.s8 %v1754
      %v1756 = vlaneseq
      %v1757 = vshrl.u32 %v1756, 7
      %v1758 = vsub.s32 %v1755, %v1757
      %v1759 = vrot.slane %v1751, %v1758
      %v1761 = vunpack.c.l.s4 1934713408
      %v1762 = vunpack.c.0.s8 %v1761
      %v1763 = vlaneseq
      %v1764 = vshrl.u32 %v1763, 7
      %v1765 = vsub.s32 %v1762, %v1764
      %v1766 = vrot.slane %v1752, %v1765
      %v1767 = vcombine.high %v1743, 0.0
      %v1768 = vcombine.high %v1750, 0.0
      %v1769 = vcombine.high %v1759, 0.0
      %v1770 = vcombine.high %v1766, 0.0
      %1772 = vrot.lane.b32.xlu0 %v1699, 16
      %v1773 = vpop.permute.xlu0 %1772
      %1776 = vrot.lane.b32.xlu0 %v1682, 32
      %v1777 = vpop.permute.xlu0 %1776
      %1780 = vrot.lane.b32.xlu0 %v1700, 48
      %v1781 = vpop.permute.xlu0 %1780
      %1784 = vrot.lane.b32.xlu0 %v1691, 64
      %v1785 = vpop.permute.xlu0 %1784
      %1788 = vrot.lane.b32.xlu0 %v1701, 80
      %v1789 = vpop.permute.xlu0 %1788
      %1792 = vrot.lane.b32.xlu0 %v1698, 96
      %v1793 = vpop.permute.xlu0 %1792
      %1796 = vrot.lane.b32.xlu0 %v1702, 112
      %v1797 = vpop.permute.xlu0 %1796
      %1800 = vrot.lane.b32.xlu0 %v1767, 16
      %v1801 = vpop.permute.xlu0 %1800
      %1804 = vrot.lane.b32.xlu0 %v1750, 32
      %v1805 = vpop.permute.xlu0 %1804
      %1808 = vrot.lane.b32.xlu0 %v1768, 48
      %v1809 = vpop.permute.xlu0 %1808
      %1812 = vrot.lane.b32.xlu0 %v1759, 64
      %v1813 = vpop.permute.xlu0 %1812
      %1816 = vrot.lane.b32.xlu0 %v1769, 80
      %v1817 = vpop.permute.xlu0 %1816
      %1820 = vrot.lane.b32.xlu0 %v1766, 96
      %v1821 = vpop.permute.xlu0 %1820
      %1824 = vrot.lane.b32.xlu0 %v1770, 112
      %v1825 = vpop.permute.xlu0 %1824
      %v1827 = vsel %vm388, %v1675, %v1773
      %v1828 = vsel %vm390, %v1827, %v1777
      %v1829 = vsel %vm392, %v1828, %v1781
      %v1830 = vsel %vm394, %v1829, %v1785
      %v1831 = vsel %vm396, %v1830, %v1789
      %v1832 = vsel %vm398, %v1831, %v1793
      %v1833 = vsel %vm400, %v1832, %v1797
      %v1834 = vsel %vm388, %v1743, %v1801
      %v1835 = vsel %vm390, %v1834, %v1805
      %v1836 = vsel %vm392, %v1835, %v1809
      %v1837 = vsel %vm394, %v1836, %v1813
      %v1838 = vsel %vm396, %v1837, %v1817
      %v1839 = vsel %vm398, %v1838, %v1821
      %v1840 = vsel %vm400, %v1839, %v1825
      %1841 = vst [vmem:[#allocation2 + $0x30] sm:$0xf] %v1833
      %1842 = vst [vmem:[#allocation2 + $0x38] sm:$0xf] %v1840
      %1843 = vrot.lane.b32.xlu0 %v1609, 127
      %v1844 = vpop.permute.xlu0 %1843
      %1845 = vrot.lane.b32.xlu0 %v1611, 127
      %v1846 = vpop.permute.xlu0 %1845
      %1847 = vrot.lane.b32.xlu0 %v1614, 127
      %v1848 = vpop.permute.xlu0 %1847
      %1849 = vrot.lane.b32.xlu0 %v1616, 127
      %v1850 = vpop.permute.xlu0 %1849
      %1851 = vrot.lane.b32.xlu0 %v1619, 127
      %v1852 = vpop.permute.xlu0 %1851
      %1853 = vrot.lane.b32.xlu0 %v1621, 127
      %v1854 = vpop.permute.xlu0 %1853
      %1855 = vrot.lane.b32.xlu0 %v1624, 127
      %v1856 = vpop.permute.xlu0 %1855
      %1857 = vrot.lane.b32.xlu0 %v1626, 127
      %v1858 = vpop.permute.xlu0 %1857
      %v1867 = vcombine.low %v1844, %v1852
      %v1868 = vcombine.high %v1844, %v1852
      %v1870 = vunpack.c.l.s4 1983009808
      %v1871 = vunpack.c.0.s8 %v1870
      %v1872 = vlaneseq
      %v1873 = vshrl.u32 %v1872, 7
      %v1874 = vsub.s32 %v1871, %v1873
      %v1875 = vrot.slane %v1867, %v1874
      %v1877 = vunpack.c.l.s4 1983009808
      %v1878 = vunpack.c.0.s8 %v1877
      %v1879 = vlaneseq
      %v1880 = vshrl.u32 %v1879, 7
      %v1881 = vsub.s32 %v1878, %v1880
      %v1882 = vrot.slane %v1868, %v1881
      %v1883 = vcombine.low %v1848, %v1856
      %v1884 = vcombine.high %v1848, %v1856
      %v1886 = vunpack.c.l.s4 1983009808
      %v1887 = vunpack.c.0.s8 %v1886
      %v1888 = vlaneseq
      %v1889 = vshrl.u32 %v1888, 7
      %v1890 = vsub.s32 %v1887, %v1889
      %v1891 = vrot.slane %v1883, %v1890
      %v1893 = vunpack.c.l.s4 1983009808
      %v1894 = vunpack.c.0.s8 %v1893
      %v1895 = vlaneseq
      %v1896 = vshrl.u32 %v1895, 7
      %v1897 = vsub.s32 %v1894, %v1896
      %v1898 = vrot.slane %v1884, %v1897
      %v1899 = vcombine.low %v1875, %v1891
      %v1900 = vcombine.high %v1875, %v1891
      %v1902 = vunpack.c.l.s4 1934713408
      %v1903 = vunpack.c.0.s8 %v1902
      %v1904 = vlaneseq
      %v1905 = vshrl.u32 %v1904, 7
      %v1906 = vsub.s32 %v1903, %v1905
      %v1907 = vrot.slane %v1899, %v1906
      %v1909 = vunpack.c.l.s4 1934713408
      %v1910 = vunpack.c.0.s8 %v1909
      %v1911 = vlaneseq
      %v1912 = vshrl.u32 %v1911, 7
      %v1913 = vsub.s32 %v1910, %v1912
      %v1914 = vrot.slane %v1900, %v1913
      %v1915 = vcombine.low %v1882, %v1898
      %v1916 = vcombine.high %v1882, %v1898
      %v1918 = vunpack.c.l.s4 1934713408
      %v1919 = vunpack.c.0.s8 %v1918
      %v1920 = vlaneseq
      %v1921 = vshrl.u32 %v1920, 7
      %v1922 = vsub.s32 %v1919, %v1921
      %v1923 = vrot.slane %v1915, %v1922
      %v1925 = vunpack.c.l.s4 1934713408
      %v1926 = vunpack.c.0.s8 %v1925
      %v1927 = vlaneseq
      %v1928 = vshrl.u32 %v1927, 7
      %v1929 = vsub.s32 %v1926, %v1928
      %v1930 = vrot.slane %v1916, %v1929
      %v1931 = vcombine.high %v1907, 0.0
      %v1932 = vcombine.high %v1914, 0.0
      %v1933 = vcombine.high %v1923, 0.0
      %v1934 = vcombine.high %v1930, 0.0
      %v1935 = vcombine.low %v1846, %v1854
      %v1936 = vcombine.high %v1846, %v1854
      %v1938 = vunpack.c.l.s4 1983009808
      %v1939 = vunpack.c.0.s8 %v1938
      %v1940 = vlaneseq
      %v1941 = vshrl.u32 %v1940, 7
      %v1942 = vsub.s32 %v1939, %v1941
      %v1943 = vrot.slane %v1935, %v1942
      %v1945 = vunpack.c.l.s4 1983009808
      %v1946 = vunpack.c.0.s8 %v1945
      %v1947 = vlaneseq
      %v1948 = vshrl.u32 %v1947, 7
      %v1949 = vsub.s32 %v1946, %v1948
      %v1950 = vrot.slane %v1936, %v1949
      %v1951 = vcombine.low %v1850, %v1858
      %v1952 = vcombine.high %v1850, %v1858
      %v1954 = vunpack.c.l.s4 1983009808
      %v1955 = vunpack.c.0.s8 %v1954
      %v1956 = vlaneseq
      %v1957 = vshrl.u32 %v1956, 7
      %v1958 = vsub.s32 %v1955, %v1957
      %v1959 = vrot.slane %v1951, %v1958
      %v1961 = vunpack.c.l.s4 1983009808
      %v1962 = vunpack.c.0.s8 %v1961
      %v1963 = vlaneseq
      %v1964 = vshrl.u32 %v1963, 7
      %v1965 = vsub.s32 %v1962, %v1964
      %v1966 = vrot.slane %v1952, %v1965
      %v1967 = vcombine.low %v1943, %v1959
      %v1968 = vcombine.high %v1943, %v1959
      %v1970 = vunpack.c.l.s4 1934713408
      %v1971 = vunpack.c.0.s8 %v1970
      %v1972 = vlaneseq
      %v1973 = vshrl.u32 %v1972, 7
      %v1974 = vsub.s32 %v1971, %v1973
      %v1975 = vrot.slane %v1967, %v1974
      %v1977 = vunpack.c.l.s4 1934713408
      %v1978 = vunpack.c.0.s8 %v1977
      %v1979 = vlaneseq
      %v1980 = vshrl.u32 %v1979, 7
      %v1981 = vsub.s32 %v1978, %v1980
      %v1982 = vrot.slane %v1968, %v1981
      %v1983 = vcombine.low %v1950, %v1966
      %v1984 = vcombine.high %v1950, %v1966
      %v1986 = vunpack.c.l.s4 1934713408
      %v1987 = vunpack.c.0.s8 %v1986
      %v1988 = vlaneseq
      %v1989 = vshrl.u32 %v1988, 7
      %v1990 = vsub.s32 %v1987, %v1989
      %v1991 = vrot.slane %v1983, %v1990
      %v1993 = vunpack.c.l.s4 1934713408
      %v1994 = vunpack.c.0.s8 %v1993
      %v1995 = vlaneseq
      %v1996 = vshrl.u32 %v1995, 7
      %v1997 = vsub.s32 %v1994, %v1996
      %v1998 = vrot.slane %v1984, %v1997
      %v1999 = vcombine.high %v1975, 0.0
      %v2000 = vcombine.high %v1982, 0.0
      %v2001 = vcombine.high %v1991, 0.0
      %v2002 = vcombine.high %v1998, 0.0
      %2004 = vrot.lane.b32.xlu0 %v1931, 16
      %v2005 = vpop.permute.xlu0 %2004
      %2008 = vrot.lane.b32.xlu0 %v1914, 32
      %v2009 = vpop.permute.xlu0 %2008
      %2012 = vrot.lane.b32.xlu0 %v1932, 48
      %v2013 = vpop.permute.xlu0 %2012
      %2016 = vrot.lane.b32.xlu0 %v1923, 64
      %v2017 = vpop.permute.xlu0 %2016
      %2020 = vrot.lane.b32.xlu0 %v1933, 80
      %v2021 = vpop.permute.xlu0 %2020
      %2024 = vrot.lane.b32.xlu0 %v1930, 96
      %v2025 = vpop.permute.xlu0 %2024
      %2028 = vrot.lane.b32.xlu0 %v1934, 112
      %v2029 = vpop.permute.xlu0 %2028
      %2032 = vrot.lane.b32.xlu0 %v1999, 16
      %v2033 = vpop.permute.xlu0 %2032
      %2036 = vrot.lane.b32.xlu0 %v1982, 32
      %v2037 = vpop.permute.xlu0 %2036
      %2040 = vrot.lane.b32.xlu0 %v2000, 48
      %v2041 = vpop.permute.xlu0 %2040
      %2044 = vrot.lane.b32.xlu0 %v1991, 64
      %v2045 = vpop.permute.xlu0 %2044
      %2048 = vrot.lane.b32.xlu0 %v2001, 80
      %v2049 = vpop.permute.xlu0 %2048
      %2052 = vrot.lane.b32.xlu0 %v1998, 96
      %v2053 = vpop.permute.xlu0 %2052
      %2056 = vrot.lane.b32.xlu0 %v2002, 112
      %v2057 = vpop.permute.xlu0 %2056
      %v2059 = vsel %vm388, %v1907, %v2005
      %v2060 = vsel %vm390, %v2059, %v2009
      %v2061 = vsel %vm392, %v2060, %v2013
      %v2062 = vsel %vm394, %v2061, %v2017
      %v2063 = vsel %vm396, %v2062, %v2021
      %v2064 = vsel %vm398, %v2063, %v2025
      %v2065 = vsel %vm400, %v2064, %v2029
      %v2066 = vsel %vm388, %v1975, %v2033
      %v2067 = vsel %vm390, %v2066, %v2037
      %v2068 = vsel %vm392, %v2067, %v2041
      %v2069 = vsel %vm394, %v2068, %v2045
      %v2070 = vsel %vm396, %v2069, %v2049
      %v2071 = vsel %vm398, %v2070, %v2053
      %v2072 = vsel %vm400, %v2071, %v2057
      %v2075 = vrot.slane %v2065, 4
      %v2076 = vrot.slane %v2072, 4
      %2079 = vst [vmem:[#allocation2 + $0x30] sm:$0xf0] %v2075
      %2080 = vst [vmem:[#allocation2 + $0x38] sm:$0xf0] %v2076
      %2081 = vrot.lane.b32.xlu0 %v1609, 126
      %v2082 = vpop.permute.xlu0 %2081
      %2083 = vrot.lane.b32.xlu0 %v1611, 126
      %v2084 = vpop.permute.xlu0 %2083
      %2085 = vrot.lane.b32.xlu0 %v1614, 126
      %v2086 = vpop.permute.xlu0 %2085
      %2087 = vrot.lane.b32.xlu0 %v1616, 126
      %v2088 = vpop.permute.xlu0 %2087
      %2089 = vrot.lane.b32.xlu0 %v1619, 126
      %v2090 = vpop.permute.xlu0 %2089
      %2091 = vrot.lane.b32.xlu0 %v1621, 126
      %v2092 = vpop.permute.xlu0 %2091
      %2093 = vrot.lane.b32.xlu0 %v1624, 126
      %v2094 = vpop.permute.xlu0 %2093
      %2095 = vrot.lane.b32.xlu0 %v1626, 126
      %v2096 = vpop.permute.xlu0 %2095
      %v2105 = vcombine.low %v2082, %v2090
      %v2106 = vcombine.high %v2082, %v2090
      %v2108 = vunpack.c.l.s4 1983009808
      %v2109 = vunpack.c.0.s8 %v2108
      %v2110 = vlaneseq
      %v2111 = vshrl.u32 %v2110, 7
      %v2112 = vsub.s32 %v2109, %v2111
      %v2113 = vrot.slane %v2105, %v2112
      %v2115 = vunpack.c.l.s4 1983009808
      %v2116 = vunpack.c.0.s8 %v2115
      %v2117 = vlaneseq
      %v2118 = vshrl.u32 %v2117, 7
      %v2119 = vsub.s32 %v2116, %v2118
      %v2120 = vrot.slane %v2106, %v2119
      %v2121 = vcombine.low %v2086, %v2094
      %v2122 = vcombine.high %v2086, %v2094
      %v2124 = vunpack.c.l.s4 1983009808
      %v2125 = vunpack.c.0.s8 %v2124
      %v2126 = vlaneseq
      %v2127 = vshrl.u32 %v2126, 7
      %v2128 = vsub.s32 %v2125, %v2127
      %v2129 = vrot.slane %v2121, %v2128
      %v2131 = vunpack.c.l.s4 1983009808
      %v2132 = vunpack.c.0.s8 %v2131
      %v2133 = vlaneseq
      %v2134 = vshrl.u32 %v2133, 7
      %v2135 = vsub.s32 %v2132, %v2134
      %v2136 = vrot.slane %v2122, %v2135
      %v2137 = vcombine.low %v2113, %v2129
      %v2138 = vcombine.high %v2113, %v2129
      %v2140 = vunpack.c.l.s4 1934713408
      %v2141 = vunpack.c.0.s8 %v2140
      %v2142 = vlaneseq
      %v2143 = vshrl.u32 %v2142, 7
      %v2144 = vsub.s32 %v2141, %v2143
      %v2145 = vrot.slane %v2137, %v2144
      %v2147 = vunpack.c.l.s4 1934713408
      %v2148 = vunpack.c.0.s8 %v2147
      %v2149 = vlaneseq
      %v2150 = vshrl.u32 %v2149, 7
      %v2151 = vsub.s32 %v2148, %v2150
      %v2152 = vrot.slane %v2138, %v2151
      %v2153 = vcombine.low %v2120, %v2136
      %v2154 = vcombine.high %v2120, %v2136
      %v2156 = vunpack.c.l.s4 1934713408
      %v2157 = vunpack.c.0.s8 %v2156
      %v2158 = vlaneseq
      %v2159 = vshrl.u32 %v2158, 7
      %v2160 = vsub.s32 %v2157, %v2159
      %v2161 = vrot.slane %v2153, %v2160
      %v2163 = vunpack.c.l.s4 1934713408
      %v2164 = vunpack.c.0.s8 %v2163
      %v2165 = vlaneseq
      %v2166 = vshrl.u32 %v2165, 7
      %v2167 = vsub.s32 %v2164, %v2166
      %v2168 = vrot.slane %v2154, %v2167
      %v2169 = vcombine.high %v2145, 0.0
      %v2170 = vcombine.high %v2152, 0.0
      %v2171 = vcombine.high %v2161, 0.0
      %v2172 = vcombine.high %v2168, 0.0
      %v2173 = vcombine.low %v2084, %v2092
      %v2174 = vcombine.high %v2084, %v2092
      %v2176 = vunpack.c.l.s4 1983009808
      %v2177 = vunpack.c.0.s8 %v2176
      %v2178 = vlaneseq
      %v2179 = vshrl.u32 %v2178, 7
      %v2180 = vsub.s32 %v2177, %v2179
      %v2181 = vrot.slane %v2173, %v2180
      %v2183 = vunpack.c.l.s4 1983009808
      %v2184 = vunpack.c.0.s8 %v2183
      %v2185 = vlaneseq
      %v2186 = vshrl.u32 %v2185, 7
      %v2187 = vsub.s32 %v2184, %v2186
      %v2188 = vrot.slane %v2174, %v2187
      %v2189 = vcombine.low %v2088, %v2096
      %v2190 = vcombine.high %v2088, %v2096
      %v2192 = vunpack.c.l.s4 1983009808
      %v2193 = vunpack.c.0.s8 %v2192
      %v2194 = vlaneseq
      %v2195 = vshrl.u32 %v2194, 7
      %v2196 = vsub.s32 %v2193, %v2195
      %v2197 = vrot.slane %v2189, %v2196
      %v2199 = vunpack.c.l.s4 1983009808
      %v2200 = vunpack.c.0.s8 %v2199
      %v2201 = vlaneseq
      %v2202 = vshrl.u32 %v2201, 7
      %v2203 = vsub.s32 %v2200, %v2202
      %v2204 = vrot.slane %v2190, %v2203
      %v2205 = vcombine.low %v2181, %v2197
      %v2206 = vcombine.high %v2181, %v2197
      %v2208 = vunpack.c.l.s4 1934713408
      %v2209 = vunpack.c.0.s8 %v2208
      %v2210 = vlaneseq
      %v2211 = vshrl.u32 %v2210, 7
      %v2212 = vsub.s32 %v2209, %v2211
      %v2213 = vrot.slane %v2205, %v2212
      %v2215 = vunpack.c.l.s4 1934713408
      %v2216 = vunpack.c.0.s8 %v2215
      %v2217 = vlaneseq
      %v2218 = vshrl.u32 %v2217, 7
      %v2219 = vsub.s32 %v2216, %v2218
      %v2220 = vrot.slane %v2206, %v2219
      %v2221 = vcombine.low %v2188, %v2204
      %v2222 = vcombine.high %v2188, %v2204
      %v2224 = vunpack.c.l.s4 1934713408
      %v2225 = vunpack.c.0.s8 %v2224
      %v2226 = vlaneseq
      %v2227 = vshrl.u32 %v2226, 7
      %v2228 = vsub.s32 %v2225, %v2227
      %v2229 = vrot.slane %v2221, %v2228
      %v2231 = vunpack.c.l.s4 1934713408
      %v2232 = vunpack.c.0.s8 %v2231
      %v2233 = vlaneseq
      %v2234 = vshrl.u32 %v2233, 7
      %v2235 = vsub.s32 %v2232, %v2234
      %v2236 = vrot.slane %v2222, %v2235
      %v2237 = vcombine.high %v2213, 0.0
      %v2238 = vcombine.high %v2220, 0.0
      %v2239 = vcombine.high %v2229, 0.0
      %v2240 = vcombine.high %v2236, 0.0
      %2242 = vrot.lane.b32.xlu0 %v2169, 16
      %v2243 = vpop.permute.xlu0 %2242
      %2246 = vrot.lane.b32.xlu0 %v2152, 32
      %v2247 = vpop.permute.xlu0 %2246
      %2250 = vrot.lane.b32.xlu0 %v2170, 48
      %v2251 = vpop.permute.xlu0 %2250
      %2254 = vrot.lane.b32.xlu0 %v2161, 64
      %v2255 = vpop.permute.xlu0 %2254
      %2258 = vrot.lane.b32.xlu0 %v2171, 80
      %v2259 = vpop.permute.xlu0 %2258
      %2262 = vrot.lane.b32.xlu0 %v2168, 96
      %v2263 = vpop.permute.xlu0 %2262
      %2266 = vrot.lane.b32.xlu0 %v2172, 112
      %v2267 = vpop.permute.xlu0 %2266
      %2270 = vrot.lane.b32.xlu0 %v2237, 16
      %v2271 = vpop.permute.xlu0 %2270
      %2274 = vrot.lane.b32.xlu0 %v2220, 32
      %v2275 = vpop.permute.xlu0 %2274
      %2278 = vrot.lane.b32.xlu0 %v2238, 48
      %v2279 = vpop.permute.xlu0 %2278
      %2282 = vrot.lane.b32.xlu0 %v2229, 64
      %v2283 = vpop.permute.xlu0 %2282
      %2286 = vrot.lane.b32.xlu0 %v2239, 80
      %v2287 = vpop.permute.xlu0 %2286
      %2290 = vrot.lane.b32.xlu0 %v2236, 96
      %v2291 = vpop.permute.xlu0 %2290
      %2294 = vrot.lane.b32.xlu0 %v2240, 112
      %v2295 = vpop.permute.xlu0 %2294
      %v2297 = vsel %vm388, %v2145, %v2243
      %v2298 = vsel %vm390, %v2297, %v2247
      %v2299 = vsel %vm392, %v2298, %v2251
      %v2300 = vsel %vm394, %v2299, %v2255
      %v2301 = vsel %vm396, %v2300, %v2259
      %v2302 = vsel %vm398, %v2301, %v2263
      %v2303 = vsel %vm400, %v2302, %v2267
      %v2304 = vsel %vm388, %v2213, %v2271
      %v2305 = vsel %vm390, %v2304, %v2275
      %v2306 = vsel %vm392, %v2305, %v2279
      %v2307 = vsel %vm394, %v2306, %v2283
      %v2308 = vsel %vm396, %v2307, %v2287
      %v2309 = vsel %vm398, %v2308, %v2291
      %v2310 = vsel %vm400, %v2309, %v2295
      %2311 = vst [vmem:[#allocation2 + $0x40] sm:$0xf] %v2303
      %2312 = vst [vmem:[#allocation2 + $0x48] sm:$0xf] %v2310
      %v2313 = vld [vmem:[#allocation2] sm:$0xff]
      %v2314 = vld [vmem:[#allocation2 + $0x8] sm:$0xff]
      %v2315 = vld [vmem:[#allocation2 + $0x10] sm:$0xff]
      %v2316 = vld [vmem:[#allocation2 + $0x18] sm:$0xff]
      %v2317 = vld [vmem:[#allocation2 + $0x20] sm:$0xff]
      %v2318 = vld [vmem:[#allocation2 + $0x28] sm:$0xff]
      %v2319 = vld [vmem:[#allocation2 + $0x30] sm:$0xff]
      %v2320 = vld [vmem:[#allocation2 + $0x38] sm:$0xff]
      %v2321 = vld [vmem:[#allocation2 + $0x40] sm:$0xf]
      %v2322 = vld [vmem:[#allocation2 + $0x48] sm:$0xf]
      %v2323 = vpack.c.bf16 %v2315, %v2313
      %v2324 = vpack.c.bf16 %v2316, %v2314
      %v2325 = vpack.c.bf16 %v2319, %v2317
      %v2326 = vpack.c.bf16 %v2320, %v2318
      %v2327 = vpack.c.bf16 %v2321, %v2321
      %v2328 = vpack.c.bf16 %v2322, %v2322
      %v2329 = vld [vmem:[%s1] sm:$0xf]
      %v2330 = vld [vmem:[%s2] sm:$0xff]
      %2332 = vset.pattern.permute.xlu0 0
      %2333 = vperm.xlu0 %2332, %v2330
      %v2334 = vpop.permute.xlu0 %2333
      %vm2336 = vcmask 293888
      %v2338 = vsel %vm2336, %v2329, 0
      %vm2340 = vcmask 1041408
      %v2342 = vsel %vm2340, %v2327, 0
      %v2345 = vsel %vm2340, %v2328, 0
      %2347 = vmatprep.subr.bf16.mxu0 %v2324
      %2348 = vmatpush1.bf16.msra.mxu0 %v2323
      %2349 = vmatprep.subr.bf16.mxu0 %v2326
      %2350 = vmatpush1.bf16.msra.mxu0 %v2325
      %2351 = vmatprep.subr.bf16.mxu0 %v2345
      %2352 = vmatpush1.bf16.msra.mxu0 %v2342
      %2353 = vmatprep.subr.bf16.mxu0 0
      %2354 = vmatpush1.bf16.msra.mxu0 0
      %2355 = vmatprep.subr.bf16.mxu0 0
      %2356 = vmatpush1.bf16.msra.mxu0 0
      %2357 = vmatprep.subr.bf16.mxu0 0
      %2358 = vmatpush1.bf16.msra.mxu0 0
      %2359 = vmatprep.subr.bf16.mxu0 0
      %2360 = vmatpush1.bf16.msra.mxu0 0
      %2361 = vmatprep.subr.bf16.mxu0 0
      %2362 = vmatpush1.bf16.msra.mxu0 0
      %2363 = vmatprep.subr.bf16.mxu0 0
      %2364 = vmatpush1.bf16.msra.mxu0 0
      %2365 = vmatprep.subr.bf16.mxu0 0
      %2366 = vmatpush1.bf16.msra.mxu0 0
      %2367 = vmatprep.subr.bf16.mxu0 0
      %2368 = vmatpush1.bf16.msra.mxu0 0
      %2369 = vmatprep.subr.bf16.mxu0 0
      %2370 = vmatpush1.bf16.msra.mxu0 0
      %2371 = vmatprep.subr.bf16.mxu0 0
      %2372 = vmatpush1.bf16.msra.mxu0 0
      %2373 = vmatprep.subr.bf16.mxu0 0
      %2374 = vmatpush1.bf16.msra.mxu0 0
      %2375 = vmatprep.subr.bf16.mxu0 0
      %2376 = vmatpush1.bf16.msra.mxu0 0
      %2377 = vmatprep.subr.bf16.mxu0 0
      %2378 = vmatpush1.bf16.msra.mxu0 0
      %2379 = vmatprep.mubr.bf16.mxu0 0
      %2380 = vmatmul.mubr.bf16.gmra.mrb[0].mxu0 %v2338
      %v2381 = vpop.f32.mrb[0].mxu0
      %v2382 = vadd.f32 %v2334, %v2381
      %v2383 = vpop.f32.mrb[0].mxu0
      %v2384 = vadd.f32 %v2334, %v2383
      %v2385 = vpop.f32.mrb[0].mxu0
      %v2386 = vpop.f32.mrb[0].mxu0
      %2387 = vdwg.mxu0
      %v2388 = vmax.f32 %v2382, 0.0
      %v2389 = vmax.f32 %v2384, 0.0
      %2390 = vst [vmem:[%s170] sm:$0xff] %v2388
      %2391 = vst [vmem:[%s170 + $0x8] sm:$0xff] %v2389
      %p2392 = scmp.lt.s32.totalorder %s14, 1
      %s2393 = scalar_select %p2392, %s14, 1
      %s2394 = smul.addr %s2393, 2
      %s2395 = smul.addr %s2394, 8
      %s2396 = scalar_lea.vmem %s3, %s2395
      // Predicated region
      $region33: #{conv_bn_relu.1} parent=31 // pred_check
        %p2397 = pneg %p100
      $region34: #{conv_bn_relu.1} parent=31 // pred_check_branch
        %2399 = sbr.rel (%p2397) target = $region36
      $region35: #{conv_bn_relu.1} parent=31 // pred_region
        _
      $region36: #{conv_bn_relu.1} parent=31 // pred_fallthru
        _
    $region32: #{conv_bn_relu.1} parent=5 // pred_fallthru
      _
    %p2400 = scmp.le.s32.totalorder 2, %s9
    // Predicated region
    $region37: #{conv_bn_relu.1} parent=5 // pred_check
      %p2401 = pneg %p2400
    $region38: #{conv_bn_relu.1} parent=5 // pred_check_branch
      %2403 = sbr.rel (%p2401) target = $region40
    $region39: #{conv_bn_relu.1} parent=5 // pred_region
      %s2404 = ssub.s32 %s9, 2
      // Predicated region
      $region41: #{conv_bn_relu.1} parent=39 // pred_check
        %p2405 = pneg %p106
      $region42: #{conv_bn_relu.1} parent=39 // pred_check_branch
        %2407 = sbr.rel (%p2405) target = $region44
      $region43: #{conv_bn_relu.1} parent=39 // pred_region
        %p2408 = scmp.lt.s32.totalorder %s15, 1
        %s2409 = scalar_select %p2408, %s15, 1
        %s2410 = smul.addr %s2409, 2
        %s2411 = smul.addr %s2410, 8
        %s2412 = scalar_lea.vmem %s3, %s2411
      $region44: #{conv_bn_relu.1} parent=39 // pred_fallthru
        _
    $region40: #{conv_bn_relu.1} parent=5 // pred_fallthru
      _
  $region6: #{conv_bn_relu.1} parent=0 // loop_footer
    %s13 = sadd.s32 1, %s9
  $region7: #{conv_bn_relu.1} parent=0 // loop_footer_branch
    %8 = sbr.rel target = $region3
  $region8: #{conv_bn_relu.1} parent=0 // loop_exit
    _

</llo_original>
